<compile_context>
chip_gen: v6e
topology: v6e:2x2x1
jax: 0.10.0
libtpu: 0.0.40
codegen_flags: <defaults>
</compile_context>

<pallas_src>
import math

import jax
import jax.numpy as jnp
from jax.experimental import pallas as pl
from jax.experimental.pallas import tpu as pltpu


# ---------------------------------------------------------------------------
# Fused Pallas kernel: num_layers LSTM layers + FC head
# ---------------------------------------------------------------------------
def make_lstm_model_kernel(num_layers, S, B, H):
    def kernel(x_ref, *refs):
        # refs = [w_ih_0, w_hh_0, b_0, ..., w_ih_{L-1}, w_hh_{L-1}, b_{L-1},
        #         w_fc, b_fc, out_ref, seq_scratch]
        lstm_refs = refs[:3 * num_layers]
        wfc_ref = refs[3 * num_layers]
        bfc_ref = refs[3 * num_layers + 1]
        out_ref = refs[3 * num_layers + 2]
        seq_sc = refs[3 * num_layers + 3]

        layer_in = x_ref[...]                      # (S*B, F_in), time-major rows
        h = None
        for l in range(num_layers):
            w_ih = lstm_refs[3 * l][...]           # (F_in, 4H)  resident in VMEM
            w_hh = lstm_refs[3 * l + 1][...]       # (H, 4H)
            bias = lstm_refs[3 * l + 2][...]       # (1, 4H)

            # Hoisted input projection: one MXU matmul over all S*B rows,
            # bias folded in here (off the recurrent critical path).
            x_proj = (jnp.dot(layer_in, w_ih,
                              preferred_element_type=jnp.float32) + bias)

            h = jnp.zeros((B, H), jnp.float32)
            c = jnp.zeros((B, H), jnp.float32)
            last_layer = l == num_layers - 1

            # Fully unrolled time loop (S is static); per step only the
            # recurrent matmul + gate math sit on the serial dependency chain.
            for t in range(S):
                gates = x_proj[t * B:(t + 1) * B, :] + jnp.dot(
                    h, w_hh, preferred_element_type=jnp.float32)   # (B, 4H)
                # NOTE: with H=32 these are intra-vreg lane slices; for H a
                # multiple of 128 they become whole-vreg selections.
                i_g = jax.nn.sigmoid(gates[:, 0 * H:1 * H])
                f_g = jax.nn.sigmoid(gates[:, 1 * H:2 * H])
                g_g = jnp.tanh(gates[:, 2 * H:3 * H])
                o_g = jax.nn.sigmoid(gates[:, 3 * H:4 * H])
                c = f_g * c + i_g * g_g
                h = o_g * jnp.tanh(c)
                if not last_layer:
                    # Inter-layer activations stay in VMEM scratch (no HBM).
                    seq_sc[t * B:(t + 1) * B, :] = h

            if not last_layer:
                layer_in = seq_sc[...]             # (S*B, H) for the next layer

        # FC head on the final hidden state of the top layer only.
        out = (jnp.dot(h, wfc_ref[...], preferred_element_type=jnp.float32)
               + bfc_ref[...])
        out_ref[...] = out.astype(out_ref.dtype)

    return kernel


# ---------------------------------------------------------------------------
# Wrapper around pallas_call
# ---------------------------------------------------------------------------
def lstm_model_forward(params, x):
    """Forward pass of LSTMModel.  x: (batch, seq, in_features), batch_first."""
    B, S, F = x.shape
    num_layers = len(params["lstm"])
    H = params["lstm"][0]["w_hh_t"].shape[0]
    O = params["fc"]["w_t"].shape[1]

    # batch_first -> time-major, flattened to (S*B, F) so every projection in
    # the kernel is a clean 2-D matmul (rows t*B .. t*B+B-1 are timestep t).
    x2d = jnp.transpose(x, (1, 0, 2)).reshape(S * B, F).astype(jnp.float32)

    inputs = [x2d]
    in_specs = [pl.BlockSpec((S * B, F), lambda: (0, 0))]
    for layer in params["lstm"]:
        f_in = layer["w_ih_t"].shape[0]
        inputs += [layer["w_ih_t"], layer["w_hh_t"], layer["bias"]]
        in_specs += [
            pl.BlockSpec((f_in, 4 * H), lambda: (0, 0)),
            pl.BlockSpec((H, 4 * H), lambda: (0, 0)),
            pl.BlockSpec((1, 4 * H), lambda: (0, 0)),
        ]
    inputs += [params["fc"]["w_t"], params["fc"]["b"]]
    in_specs += [pl.BlockSpec((H, O), lambda: (0, 0)),
                 pl.BlockSpec((1, O), lambda: (0, 0))]

    kernel = make_lstm_model_kernel(num_layers, S, B, H)
    return pl.pallas_call(
        kernel,
        out_shape=jax.ShapeDtypeStruct((B, O), jnp.float32),
        in_specs=in_specs,
        out_specs=pl.BlockSpec((B, O), lambda: (0, 0)),
        # Inter-layer hidden-state sequence stays in VMEM only.  For much
        # larger hidden_units, raise vmem_limit_bytes via
        # pltpu.CompilerParams (v7x has half the VMEM of v5e/v6e).
        scratch_shapes=[pltpu.VMEM((S * B, H), jnp.float32)],
    )(*inputs)


# ---------------------------------------------------------------------------
# Deterministic parameter initialization (PyTorch-style uniform(-k, k))
# ---------------------------------------------------------------------------
def init_params(key, in_features, hidden_units, out_features, num_layers):
    k = 1.0 / math.sqrt(hidden_units)
    params = {"lstm": [], "fc": {}}
    for layer in range(num_layers):
        f_in = in_features if layer == 0 else hidden_units
        key, k1, k2, k3, k4 = jax.random.split(key, 5)
        w_ih = jax.random.uniform(k1, (4 * hidden_units, f_in),
                                  minval=-k, maxval=k, dtype=jnp.float32)
        w_hh = jax.random.uniform(k2, (4 * hidden_units, hidden_units),
                                  minval=-k, maxval=k, dtype=jnp.float32)
        b_ih = jax.random.uniform(k3, (4 * hidden_units,),
                                  minval=-k, maxval=k, dtype=jnp.float32)
        b_hh = jax.random.uniform(k4, (4 * hidden_units,),
                                  minval=-k, maxval=k, dtype=jnp.float32)
        params["lstm"].append({
            "w_ih_t": w_ih.T,                        # (F, 4H)
            "w_hh_t": w_hh.T,                        # (H, 4H)
            "bias": (b_ih + b_hh).reshape(1, -1),    # (1, 4H)
        })
    key, k1, k2 = jax.random.split(key, 3)
    kf = 1.0 / math.sqrt(hidden_units)
    w_fc = jax.random.uniform(k1, (out_features, hidden_units),
                              minval=-kf, maxval=kf, dtype=jnp.float32)
    b_fc = jax.random.uniform(k2, (out_features,),
                              minval=-kf, maxval=kf, dtype=jnp.float32)
    params["fc"]["w_t"] = w_fc.T                     # (H, O)
    params["fc"]["b"] = b_fc.reshape(1, -1)          # (1, O)
    return params


# ---------------------------------------------------------------------------
# Pure-JAX reference (for correctness check)
# ---------------------------------------------------------------------------
def reference_forward(params, x):
    x_tm = jnp.transpose(x, (1, 0, 2)).astype(jnp.float32)
    for layer in params["lstm"]:
        H = layer["w_hh_t"].shape[0]
        B = x_tm.shape[1]

        def step(carry, x_t, layer=layer, H=H):
            h, c = carry
            gates = x_t @ layer["w_ih_t"] + h @ layer["w_hh_t"] + layer["bias"]
            i = jax.nn.sigmoid(gates[:, 0 * H:1 * H])
            f = jax.nn.sigmoid(gates[:, 1 * H:2 * H])
            g = jnp.tanh(gates[:, 2 * H:3 * H])
            o = jax.nn.sigmoid(gates[:, 3 * H:4 * H])
            c = f * c + i * g
            h = o * jnp.tanh(c)
            return (h, c), h

        init = (jnp.zeros((B, H), jnp.float32), jnp.zeros((B, H), jnp.float32))
        _, hs = jax.lax.scan(step, init, x_tm)
        x_tm = hs
    return x_tm[-1] @ params["fc"]["w_t"] + params["fc"]["b"]


# ---------------------------------------------------------------------------
if __name__ == "__main__":
    batch, seq = 2, 8
    in_features, hidden_units, out_features = 4, 32, 3
    stacked_layer_count = 2

    key = jax.random.PRNGKey(0)
    key, pkey, xkey = jax.random.split(key, 3)
    params = init_params(pkey, in_features, hidden_units, out_features,
                         stacked_layer_count)
    x = jax.random.normal(xkey, (batch, seq, in_features), dtype=jnp.float32)

    out = lstm_model_forward(params, x)
    out = jax.block_until_ready(out)

    ref = jax.block_until_ready(reference_forward(params, x))
    assert out.shape == (batch, out_features)
    assert jnp.allclose(out, ref, atol=1e-5, rtol=1e-5), "mismatch vs reference"

    print("KERNEL_OK")
</pallas_src>

<mosaic_0001>
module attributes {stable_mosaic.version = 11 : i64} {
  func.func @kernel(%arg0: memref<16x4xf32, #tpu.memory_space<vmem>>, %arg1: memref<4x128xf32, #tpu.memory_space<vmem>>, %arg2: memref<32x128xf32, #tpu.memory_space<vmem>>, %arg3: memref<1x128xf32, #tpu.memory_space<vmem>>, %arg4: memref<32x128xf32, #tpu.memory_space<vmem>>, %arg5: memref<32x128xf32, #tpu.memory_space<vmem>>, %arg6: memref<1x128xf32, #tpu.memory_space<vmem>>, %arg7: memref<32x3xf32, #tpu.memory_space<vmem>>, %arg8: memref<1x3xf32, #tpu.memory_space<vmem>>, %arg9: memref<2x3xf32, #tpu.memory_space<vmem>>, %arg10: memref<16x32xf32, #tpu.memory_space<vmem>>) attributes {dimension_semantics = [], scalar_prefetch = 0 : i64, scratch_operands = 1 : i64, tpu.core_type = #tpu.core_type<tc>} {
    %c0 = arith.constant 0 : index
    %c0_0 = arith.constant 0 : index
    %0 = vector.load %arg0[%c0, %c0_0] : memref<16x4xf32, #tpu.memory_space<vmem>>, vector<16x4xf32>
    %c0_1 = arith.constant 0 : index
    %c0_2 = arith.constant 0 : index
    %1 = vector.load %arg1[%c0_1, %c0_2] : memref<4x128xf32, #tpu.memory_space<vmem>>, vector<4x128xf32>
    %c0_3 = arith.constant 0 : index
    %c0_4 = arith.constant 0 : index
    %2 = vector.load %arg2[%c0_3, %c0_4] : memref<32x128xf32, #tpu.memory_space<vmem>>, vector<32x128xf32>
    %c0_5 = arith.constant 0 : index
    %c0_6 = arith.constant 0 : index
    %3 = vector.load %arg3[%c0_5, %c0_6] : memref<1x128xf32, #tpu.memory_space<vmem>>, vector<1x128xf32>
    %cst = arith.constant dense<0.000000e+00> : vector<16x128xf32>
    %4 = tpu.matmul %0, %1, %cst {dimension_numbers = #tpu.dot_dimension_numbers<[1], [0], [0], [1], [0, 0, 1, 1], [], []>} : vector<16x4xf32>, vector<4x128xf32>, vector<16x128xf32> -> vector<16x128xf32>
    %5 = vector.broadcast %3 : vector<1x128xf32> to vector<16x128xf32>
    %6 = arith.addf %4, %5 : vector<16x128xf32>
    %cst_7 = arith.constant 0.000000e+00 : f32
    %7 = vector.broadcast %cst_7 : f32 to vector<2x32xf32>
    %cst_8 = arith.constant 0.000000e+00 : f32
    %8 = vector.broadcast %cst_8 : f32 to vector<2x32xf32>
    %9 = vector.extract_strided_slice %6 {offsets = [0, 0], sizes = [2, 128], strides = [1, 1]} : vector<16x128xf32> to vector<2x128xf32>
    %cst_9 = arith.constant dense<0.000000e+00> : vector<2x128xf32>
    %10 = tpu.matmul %7, %2, %cst_9 {dimension_numbers = #tpu.dot_dimension_numbers<[1], [0], [0], [1], [0, 0, 1, 1], [], []>} : vector<2x32xf32>, vector<32x128xf32>, vector<2x128xf32> -> vector<2x128xf32>
    %11 = arith.addf %9, %10 : vector<2x128xf32>
    %12 = vector.extract_strided_slice %11 {offsets = [0, 0], sizes = [2, 32], strides = [1, 1]} : vector<2x128xf32> to vector<2x32xf32>
    %13 = arith.negf %12 : vector<2x32xf32>
    %14 = math.exp %13 : vector<2x32xf32>
    %cst_10 = arith.constant 1.000000e+00 : f32
    %15 = vector.broadcast %cst_10 : f32 to vector<2x32xf32>
    %16 = arith.addf %15, %14 : vector<2x32xf32>
    %17 = arith.divf %15, %16 : vector<2x32xf32>
    %18 = vector.extract_strided_slice %11 {offsets = [0, 32], sizes = [2, 32], strides = [1, 1]} : vector<2x128xf32> to vector<2x32xf32>
    %19 = arith.negf %18 : vector<2x32xf32>
    %20 = math.exp %19 : vector<2x32xf32>
    %cst_11 = arith.constant 1.000000e+00 : f32
    %21 = vector.broadcast %cst_11 : f32 to vector<2x32xf32>
    %22 = arith.addf %21, %20 : vector<2x32xf32>
    %23 = arith.divf %21, %22 : vector<2x32xf32>
    %24 = vector.extract_strided_slice %11 {offsets = [0, 64], sizes = [2, 32], strides = [1, 1]} : vector<2x128xf32> to vector<2x32xf32>
    %25 = math.tanh %24 : vector<2x32xf32>
    %26 = vector.extract_strided_slice %11 {offsets = [0, 96], sizes = [2, 32], strides = [1, 1]} : vector<2x128xf32> to vector<2x32xf32>
    %27 = arith.negf %26 : vector<2x32xf32>
    %28 = math.exp %27 : vector<2x32xf32>
    %cst_12 = arith.constant 1.000000e+00 : f32
    %29 = vector.broadcast %cst_12 : f32 to vector<2x32xf32>
    %30 = arith.addf %29, %28 : vector<2x32xf32>
    %31 = arith.divf %29, %30 : vector<2x32xf32>
    %32 = arith.mulf %23, %8 : vector<2x32xf32>
    %33 = arith.mulf %17, %25 : vector<2x32xf32>
    %34 = arith.addf %32, %33 : vector<2x32xf32>
    %35 = math.tanh %34 : vector<2x32xf32>
    %36 = arith.mulf %31, %35 : vector<2x32xf32>
    %c0_13 = arith.constant 0 : index
    %c0_14 = arith.constant 0 : index
    %37 = vector.load %arg10[%c0_13, %c0_14] : memref<16x32xf32, #tpu.memory_space<vmem>>, vector<2x32xf32>
    tpu.vector_store %arg10[%c0_13, %c0_14], %36 {strides = array<i32>} : memref<16x32xf32, #tpu.memory_space<vmem>>, vector<2x32xf32>,
    %38 = vector.extract_strided_slice %6 {offsets = [2, 0], sizes = [2, 128], strides = [1, 1]} : vector<16x128xf32> to vector<2x128xf32>
    %cst_15 = arith.constant dense<0.000000e+00> : vector<2x128xf32>
    %39 = tpu.matmul %36, %2, %cst_15 {dimension_numbers = #tpu.dot_dimension_numbers<[1], [0], [0], [1], [0, 0, 1, 1], [], []>} : vector<2x32xf32>, vector<32x128xf32>, vector<2x128xf32> -> vector<2x128xf32>
    %40 = arith.addf %38, %39 : vector<2x128xf32>
    %41 = vector.extract_strided_slice %40 {offsets = [0, 0], sizes = [2, 32], strides = [1, 1]} : vector<2x128xf32> to vector<2x32xf32>
    %42 = arith.negf %41 : vector<2x32xf32>
    %43 = math.exp %42 : vector<2x32xf32>
    %cst_16 = arith.constant 1.000000e+00 : f32
    %44 = vector.broadcast %cst_16 : f32 to vector<2x32xf32>
    %45 = arith.addf %44, %43 : vector<2x32xf32>
    %46 = arith.divf %44, %45 : vector<2x32xf32>
    %47 = vector.extract_strided_slice %40 {offsets = [0, 32], sizes = [2, 32], strides = [1, 1]} : vector<2x128xf32> to vector<2x32xf32>
    %48 = arith.negf %47 : vector<2x32xf32>
    %49 = math.exp %48 : vector<2x32xf32>
    %cst_17 = arith.constant 1.000000e+00 : f32
    %50 = vector.broadcast %cst_17 : f32 to vector<2x32xf32>
    %51 = arith.addf %50, %49 : vector<2x32xf32>
    %52 = arith.divf %50, %51 : vector<2x32xf32>
    %53 = vector.extract_strided_slice %40 {offsets = [0, 64], sizes = [2, 32], strides = [1, 1]} : vector<2x128xf32> to vector<2x32xf32>
    %54 = math.tanh %53 : vector<2x32xf32>
    %55 = vector.extract_strided_slice %40 {offsets = [0, 96], sizes = [2, 32], strides = [1, 1]} : vector<2x128xf32> to vector<2x32xf32>
    %56 = arith.negf %55 : vector<2x32xf32>
    %57 = math.exp %56 : vector<2x32xf32>
    %cst_18 = arith.constant 1.000000e+00 : f32
    %58 = vector.broadcast %cst_18 : f32 to vector<2x32xf32>
    %59 = arith.addf %58, %57 : vector<2x32xf32>
    %60 = arith.divf %58, %59 : vector<2x32xf32>
    %61 = arith.mulf %52, %34 : vector<2x32xf32>
    %62 = arith.mulf %46, %54 : vector<2x32xf32>
    %63 = arith.addf %61, %62 : vector<2x32xf32>
    %64 = math.tanh %63 : vector<2x32xf32>
    %65 = arith.mulf %60, %64 : vector<2x32xf32>
    %c2 = arith.constant 2 : index
    %c0_19 = arith.constant 0 : index
    %66 = vector.load %arg10[%c2, %c0_19] : memref<16x32xf32, #tpu.memory_space<vmem>>, vector<2x32xf32>
    tpu.vector_store %arg10[%c2, %c0_19], %65 {strides = array<i32>} : memref<16x32xf32, #tpu.memory_space<vmem>>, vector<2x32xf32>,
    %67 = vector.extract_strided_slice %6 {offsets = [4, 0], sizes = [2, 128], strides = [1, 1]} : vector<16x128xf32> to vector<2x128xf32>
    %cst_20 = arith.constant dense<0.000000e+00> : vector<2x128xf32>
    %68 = tpu.matmul %65, %2, %cst_20 {dimension_numbers = #tpu.dot_dimension_numbers<[1], [0], [0], [1], [0, 0, 1, 1], [], []>} : vector<2x32xf32>, vector<32x128xf32>, vector<2x128xf32> -> vector<2x128xf32>
    %69 = arith.addf %67, %68 : vector<2x128xf32>
    %70 = vector.extract_strided_slice %69 {offsets = [0, 0], sizes = [2, 32], strides = [1, 1]} : vector<2x128xf32> to vector<2x32xf32>
    %71 = arith.negf %70 : vector<2x32xf32>
    %72 = math.exp %71 : vector<2x32xf32>
    %cst_21 = arith.constant 1.000000e+00 : f32
    %73 = vector.broadcast %cst_21 : f32 to vector<2x32xf32>
    %74 = arith.addf %73, %72 : vector<2x32xf32>
    %75 = arith.divf %73, %74 : vector<2x32xf32>
    %76 = vector.extract_strided_slice %69 {offsets = [0, 32], sizes = [2, 32], strides = [1, 1]} : vector<2x128xf32> to vector<2x32xf32>
    %77 = arith.negf %76 : vector<2x32xf32>
    %78 = math.exp %77 : vector<2x32xf32>
    %cst_22 = arith.constant 1.000000e+00 : f32
    %79 = vector.broadcast %cst_22 : f32 to vector<2x32xf32>
    %80 = arith.addf %79, %78 : vector<2x32xf32>
    %81 = arith.divf %79, %80 : vector<2x32xf32>
    %82 = vector.extract_strided_slice %69 {offsets = [0, 64], sizes = [2, 32], strides = [1, 1]} : vector<2x128xf32> to vector<2x32xf32>
    %83 = math.tanh %82 : vector<2x32xf32>
    %84 = vector.extract_strided_slice %69 {offsets = [0, 96], sizes = [2, 32], strides = [1, 1]} : vector<2x128xf32> to vector<2x32xf32>
    %85 = arith.negf %84 : vector<2x32xf32>
    %86 = math.exp %85 : vector<2x32xf32>
    %cst_23 = arith.constant 1.000000e+00 : f32
    %87 = vector.broadcast %cst_23 : f32 to vector<2x32xf32>
    %88 = arith.addf %87, %86 : vector<2x32xf32>
    %89 = arith.divf %87, %88 : vector<2x32xf32>
    %90 = arith.mulf %81, %63 : vector<2x32xf32>
    %91 = arith.mulf %75, %83 : vector<2x32xf32>
    %92 = arith.addf %90, %91 : vector<2x32xf32>
    %93 = math.tanh %92 : vector<2x32xf32>
    %94 = arith.mulf %89, %93 : vector<2x32xf32>
    %c4 = arith.constant 4 : index
    %c0_24 = arith.constant 0 : index
    %95 = vector.load %arg10[%c4, %c0_24] : memref<16x32xf32, #tpu.memory_space<vmem>>, vector<2x32xf32>
    tpu.vector_store %arg10[%c4, %c0_24], %94 {strides = array<i32>} : memref<16x32xf32, #tpu.memory_space<vmem>>, vector<2x32xf32>,
    %96 = vector.extract_strided_slice %6 {offsets = [6, 0], sizes = [2, 128], strides = [1, 1]} : vector<16x128xf32> to vector<2x128xf32>
    %cst_25 = arith.constant dense<0.000000e+00> : vector<2x128xf32>
    %97 = tpu.matmul %94, %2, %cst_25 {dimension_numbers = #tpu.dot_dimension_numbers<[1], [0], [0], [1], [0, 0, 1, 1], [], []>} : vector<2x32xf32>, vector<32x128xf32>, vector<2x128xf32> -> vector<2x128xf32>
    %98 = arith.addf %96, %97 : vector<2x128xf32>
    %99 = vector.extract_strided_slice %98 {offsets = [0, 0], sizes = [2, 32], strides = [1, 1]} : vector<2x128xf32> to vector<2x32xf32>
    %100 = arith.negf %99 : vector<2x32xf32>
    %101 = math.exp %100 : vector<2x32xf32>
    %cst_26 = arith.constant 1.000000e+00 : f32
    %102 = vector.broadcast %cst_26 : f32 to vector<2x32xf32>
    %103 = arith.addf %102, %101 : vector<2x32xf32>
    %104 = arith.divf %102, %103 : vector<2x32xf32>
    %105 = vector.extract_strided_slice %98 {offsets = [0, 32], sizes = [2, 32], strides = [1, 1]} : vector<2x128xf32> to vector<2x32xf32>
    %106 = arith.negf %105 : vector<2x32xf32>
    %107 = math.exp %106 : vector<2x32xf32>
    %cst_27 = arith.constant 1.000000e+00 : f32
    %108 = vector.broadcast %cst_27 : f32 to vector<2x32xf32>
    %109 = arith.addf %108, %107 : vector<2x32xf32>
    %110 = arith.divf %108, %109 : vector<2x32xf32>
    %111 = vector.extract_strided_slice %98 {offsets = [0, 64], sizes = [2, 32], strides = [1, 1]} : vector<2x128xf32> to vector<2x32xf32>
    %112 = math.tanh %111 : vector<2x32xf32>
    %113 = vector.extract_strided_slice %98 {offsets = [0, 96], sizes = [2, 32], strides = [1, 1]} : vector<2x128xf32> to vector<2x32xf32>
    %114 = arith.negf %113 : vector<2x32xf32>
    %115 = math.exp %114 : vector<2x32xf32>
    %cst_28 = arith.constant 1.000000e+00 : f32
    %116 = vector.broadcast %cst_28 : f32 to vector<2x32xf32>
    %117 = arith.addf %116, %115 : vector<2x32xf32>
    %118 = arith.divf %116, %117 : vector<2x32xf32>
    %119 = arith.mulf %110, %92 : vector<2x32xf32>
    %120 = arith.mulf %104, %112 : vector<2x32xf32>
    %121 = arith.addf %119, %120 : vector<2x32xf32>
    %122 = math.tanh %121 : vector<2x32xf32>
    %123 = arith.mulf %118, %122 : vector<2x32xf32>
    %c6 = arith.constant 6 : index
    %c0_29 = arith.constant 0 : index
    %124 = vector.load %arg10[%c6, %c0_29] : memref<16x32xf32, #tpu.memory_space<vmem>>, vector<2x32xf32>
    tpu.vector_store %arg10[%c6, %c0_29], %123 {strides = array<i32>} : memref<16x32xf32, #tpu.memory_space<vmem>>, vector<2x32xf32>,
    %125 = vector.extract_strided_slice %6 {offsets = [8, 0], sizes = [2, 128], strides = [1, 1]} : vector<16x128xf32> to vector<2x128xf32>
    %cst_30 = arith.constant dense<0.000000e+00> : vector<2x128xf32>
    %126 = tpu.matmul %123, %2, %cst_30 {dimension_numbers = #tpu.dot_dimension_numbers<[1], [0], [0], [1], [0, 0, 1, 1], [], []>} : vector<2x32xf32>, vector<32x128xf32>, vector<2x128xf32> -> vector<2x128xf32>
    %127 = arith.addf %125, %126 : vector<2x128xf32>
    %128 = vector.extract_strided_slice %127 {offsets = [0, 0], sizes = [2, 32], strides = [1, 1]} : vector<2x128xf32> to vector<2x32xf32>
    %129 = arith.negf %128 : vector<2x32xf32>
    %130 = math.exp %129 : vector<2x32xf32>
    %cst_31 = arith.constant 1.000000e+00 : f32
    %131 = vector.broadcast %cst_31 : f32 to vector<2x32xf32>
    %132 = arith.addf %131, %130 : vector<2x32xf32>
    %133 = arith.divf %131, %132 : vector<2x32xf32>
    %134 = vector.extract_strided_slice %127 {offsets = [0, 32], sizes = [2, 32], strides = [1, 1]} : vector<2x128xf32> to vector<2x32xf32>
    %135 = arith.negf %134 : vector<2x32xf32>
    %136 = math.exp %135 : vector<2x32xf32>
    %cst_32 = arith.constant 1.000000e+00 : f32
    %137 = vector.broadcast %cst_32 : f32 to vector<2x32xf32>
    %138 = arith.addf %137, %136 : vector<2x32xf32>
    %139 = arith.divf %137, %138 : vector<2x32xf32>
    %140 = vector.extract_strided_slice %127 {offsets = [0, 64], sizes = [2, 32], strides = [1, 1]} : vector<2x128xf32> to vector<2x32xf32>
    %141 = math.tanh %140 : vector<2x32xf32>
    %142 = vector.extract_strided_slice %127 {offsets = [0, 96], sizes = [2, 32], strides = [1, 1]} : vector<2x128xf32> to vector<2x32xf32>
    %143 = arith.negf %142 : vector<2x32xf32>
    %144 = math.exp %143 : vector<2x32xf32>
    %cst_33 = arith.constant 1.000000e+00 : f32
    %145 = vector.broadcast %cst_33 : f32 to vector<2x32xf32>
    %146 = arith.addf %145, %144 : vector<2x32xf32>
    %147 = arith.divf %145, %146 : vector<2x32xf32>
    %148 = arith.mulf %139, %121 : vector<2x32xf32>
    %149 = arith.mulf %133, %141 : vector<2x32xf32>
    %150 = arith.addf %148, %149 : vector<2x32xf32>
    %151 = math.tanh %150 : vector<2x32xf32>
    %152 = arith.mulf %147, %151 : vector<2x32xf32>
    %c8 = arith.constant 8 : index
    %c0_34 = arith.constant 0 : index
    %153 = vector.load %arg10[%c8, %c0_34] : memref<16x32xf32, #tpu.memory_space<vmem>>, vector<2x32xf32>
    tpu.vector_store %arg10[%c8, %c0_34], %152 {strides = array<i32>} : memref<16x32xf32, #tpu.memory_space<vmem>>, vector<2x32xf32>,
    %154 = vector.extract_strided_slice %6 {offsets = [10, 0], sizes = [2, 128], strides = [1, 1]} : vector<16x128xf32> to vector<2x128xf32>
    %cst_35 = arith.constant dense<0.000000e+00> : vector<2x128xf32>
    %155 = tpu.matmul %152, %2, %cst_35 {dimension_numbers = #tpu.dot_dimension_numbers<[1], [0], [0], [1], [0, 0, 1, 1], [], []>} : vector<2x32xf32>, vector<32x128xf32>, vector<2x128xf32> -> vector<2x128xf32>
    %156 = arith.addf %154, %155 : vector<2x128xf32>
    %157 = vector.extract_strided_slice %156 {offsets = [0, 0], sizes = [2, 32], strides = [1, 1]} : vector<2x128xf32> to vector<2x32xf32>
    %158 = arith.negf %157 : vector<2x32xf32>
    %159 = math.exp %158 : vector<2x32xf32>
    %cst_36 = arith.constant 1.000000e+00 : f32
    %160 = vector.broadcast %cst_36 : f32 to vector<2x32xf32>
    %161 = arith.addf %160, %159 : vector<2x32xf32>
    %162 = arith.divf %160, %161 : vector<2x32xf32>
    %163 = vector.extract_strided_slice %156 {offsets = [0, 32], sizes = [2, 32], strides = [1, 1]} : vector<2x128xf32> to vector<2x32xf32>
    %164 = arith.negf %163 : vector<2x32xf32>
    %165 = math.exp %164 : vector<2x32xf32>
    %cst_37 = arith.constant 1.000000e+00 : f32
    %166 = vector.broadcast %cst_37 : f32 to vector<2x32xf32>
    %167 = arith.addf %166, %165 : vector<2x32xf32>
    %168 = arith.divf %166, %167 : vector<2x32xf32>
    %169 = vector.extract_strided_slice %156 {offsets = [0, 64], sizes = [2, 32], strides = [1, 1]} : vector<2x128xf32> to vector<2x32xf32>
    %170 = math.tanh %169 : vector<2x32xf32>
    %171 = vector.extract_strided_slice %156 {offsets = [0, 96], sizes = [2, 32], strides = [1, 1]} : vector<2x128xf32> to vector<2x32xf32>
    %172 = arith.negf %171 : vector<2x32xf32>
    %173 = math.exp %172 : vector<2x32xf32>
    %cst_38 = arith.constant 1.000000e+00 : f32
    %174 = vector.broadcast %cst_38 : f32 to vector<2x32xf32>
    %175 = arith.addf %174, %173 : vector<2x32xf32>
    %176 = arith.divf %174, %175 : vector<2x32xf32>
    %177 = arith.mulf %168, %150 : vector<2x32xf32>
    %178 = arith.mulf %162, %170 : vector<2x32xf32>
    %179 = arith.addf %177, %178 : vector<2x32xf32>
    %180 = math.tanh %179 : vector<2x32xf32>
    %181 = arith.mulf %176, %180 : vector<2x32xf32>
    %c10 = arith.constant 10 : index
    %c0_39 = arith.constant 0 : index
    %182 = vector.load %arg10[%c10, %c0_39] : memref<16x32xf32, #tpu.memory_space<vmem>>, vector<2x32xf32>
    tpu.vector_store %arg10[%c10, %c0_39], %181 {strides = array<i32>} : memref<16x32xf32, #tpu.memory_space<vmem>>, vector<2x32xf32>,
    %183 = vector.extract_strided_slice %6 {offsets = [12, 0], sizes = [2, 128], strides = [1, 1]} : vector<16x128xf32> to vector<2x128xf32>
    %cst_40 = arith.constant dense<0.000000e+00> : vector<2x128xf32>
    %184 = tpu.matmul %181, %2, %cst_40 {dimension_numbers = #tpu.dot_dimension_numbers<[1], [0], [0], [1], [0, 0, 1, 1], [], []>} : vector<2x32xf32>, vector<32x128xf32>, vector<2x128xf32> -> vector<2x128xf32>
    %185 = arith.addf %183, %184 : vector<2x128xf32>
    %186 = vector.extract_strided_slice %185 {offsets = [0, 0], sizes = [2, 32], strides = [1, 1]} : vector<2x128xf32> to vector<2x32xf32>
    %187 = arith.negf %186 : vector<2x32xf32>
    %188 = math.exp %187 : vector<2x32xf32>
    %cst_41 = arith.constant 1.000000e+00 : f32
    %189 = vector.broadcast %cst_41 : f32 to vector<2x32xf32>
    %190 = arith.addf %189, %188 : vector<2x32xf32>
    %191 = arith.divf %189, %190 : vector<2x32xf32>
    %192 = vector.extract_strided_slice %185 {offsets = [0, 32], sizes = [2, 32], strides = [1, 1]} : vector<2x128xf32> to vector<2x32xf32>
    %193 = arith.negf %192 : vector<2x32xf32>
    %194 = math.exp %193 : vector<2x32xf32>
    %cst_42 = arith.constant 1.000000e+00 : f32
    %195 = vector.broadcast %cst_42 : f32 to vector<2x32xf32>
    %196 = arith.addf %195, %194 : vector<2x32xf32>
    %197 = arith.divf %195, %196 : vector<2x32xf32>
    %198 = vector.extract_strided_slice %185 {offsets = [0, 64], sizes = [2, 32], strides = [1, 1]} : vector<2x128xf32> to vector<2x32xf32>
    %199 = math.tanh %198 : vector<2x32xf32>
    %200 = vector.extract_strided_slice %185 {offsets = [0, 96], sizes = [2, 32], strides = [1, 1]} : vector<2x128xf32> to vector<2x32xf32>
    %201 = arith.negf %200 : vector<2x32xf32>
    %202 = math.exp %201 : vector<2x32xf32>
    %cst_43 = arith.constant 1.000000e+00 : f32
    %203 = vector.broadcast %cst_43 : f32 to vector<2x32xf32>
    %204 = arith.addf %203, %202 : vector<2x32xf32>
    %205 = arith.divf %203, %204 : vector<2x32xf32>
    %206 = arith.mulf %197, %179 : vector<2x32xf32>
    %207 = arith.mulf %191, %199 : vector<2x32xf32>
    %208 = arith.addf %206, %207 : vector<2x32xf32>
    %209 = math.tanh %208 : vector<2x32xf32>
    %210 = arith.mulf %205, %209 : vector<2x32xf32>
    %c12 = arith.constant 12 : index
    %c0_44 = arith.constant 0 : index
    %211 = vector.load %arg10[%c12, %c0_44] : memref<16x32xf32, #tpu.memory_space<vmem>>, vector<2x32xf32>
    tpu.vector_store %arg10[%c12, %c0_44], %210 {strides = array<i32>} : memref<16x32xf32, #tpu.memory_space<vmem>>, vector<2x32xf32>,
    %212 = vector.extract_strided_slice %6 {offsets = [14, 0], sizes = [2, 128], strides = [1, 1]} : vector<16x128xf32> to vector<2x128xf32>
    %cst_45 = arith.constant dense<0.000000e+00> : vector<2x128xf32>
    %213 = tpu.matmul %210, %2, %cst_45 {dimension_numbers = #tpu.dot_dimension_numbers<[1], [0], [0], [1], [0, 0, 1, 1], [], []>} : vector<2x32xf32>, vector<32x128xf32>, vector<2x128xf32> -> vector<2x128xf32>
    %214 = arith.addf %212, %213 : vector<2x128xf32>
    %215 = vector.extract_strided_slice %214 {offsets = [0, 0], sizes = [2, 32], strides = [1, 1]} : vector<2x128xf32> to vector<2x32xf32>
    %216 = arith.negf %215 : vector<2x32xf32>
    %217 = math.exp %216 : vector<2x32xf32>
    %cst_46 = arith.constant 1.000000e+00 : f32
    %218 = vector.broadcast %cst_46 : f32 to vector<2x32xf32>
    %219 = arith.addf %218, %217 : vector<2x32xf32>
    %220 = arith.divf %218, %219 : vector<2x32xf32>
    %221 = vector.extract_strided_slice %214 {offsets = [0, 32], sizes = [2, 32], strides = [1, 1]} : vector<2x128xf32> to vector<2x32xf32>
    %222 = arith.negf %221 : vector<2x32xf32>
    %223 = math.exp %222 : vector<2x32xf32>
    %cst_47 = arith.constant 1.000000e+00 : f32
    %224 = vector.broadcast %cst_47 : f32 to vector<2x32xf32>
    %225 = arith.addf %224, %223 : vector<2x32xf32>
    %226 = arith.divf %224, %225 : vector<2x32xf32>
    %227 = vector.extract_strided_slice %214 {offsets = [0, 64], sizes = [2, 32], strides = [1, 1]} : vector<2x128xf32> to vector<2x32xf32>
    %228 = math.tanh %227 : vector<2x32xf32>
    %229 = vector.extract_strided_slice %214 {offsets = [0, 96], sizes = [2, 32], strides = [1, 1]} : vector<2x128xf32> to vector<2x32xf32>
    %230 = arith.negf %229 : vector<2x32xf32>
    %231 = math.exp %230 : vector<2x32xf32>
    %cst_48 = arith.constant 1.000000e+00 : f32
    %232 = vector.broadcast %cst_48 : f32 to vector<2x32xf32>
    %233 = arith.addf %232, %231 : vector<2x32xf32>
    %234 = arith.divf %232, %233 : vector<2x32xf32>
    %235 = arith.mulf %226, %208 : vector<2x32xf32>
    %236 = arith.mulf %220, %228 : vector<2x32xf32>
    %237 = arith.addf %235, %236 : vector<2x32xf32>
    %238 = math.tanh %237 : vector<2x32xf32>
    %239 = arith.mulf %234, %238 : vector<2x32xf32>
    %c14 = arith.constant 14 : index
    %c0_49 = arith.constant 0 : index
    %240 = vector.load %arg10[%c14, %c0_49] : memref<16x32xf32, #tpu.memory_space<vmem>>, vector<2x32xf32>
    tpu.vector_store %arg10[%c14, %c0_49], %239 {strides = array<i32>} : memref<16x32xf32, #tpu.memory_space<vmem>>, vector<2x32xf32>,
    %c0_50 = arith.constant 0 : index
    %c0_51 = arith.constant 0 : index
    %241 = vector.load %arg10[%c0_50, %c0_51] : memref<16x32xf32, #tpu.memory_space<vmem>>, vector<16x32xf32>
    %c0_52 = arith.constant 0 : index
    %c0_53 = arith.constant 0 : index
    %242 = vector.load %arg4[%c0_52, %c0_53] : memref<32x128xf32, #tpu.memory_space<vmem>>, vector<32x128xf32>
    %c0_54 = arith.constant 0 : index
    %c0_55 = arith.constant 0 : index
    %243 = vector.load %arg5[%c0_54, %c0_55] : memref<32x128xf32, #tpu.memory_space<vmem>>, vector<32x128xf32>
    %c0_56 = arith.constant 0 : index
    %c0_57 = arith.constant 0 : index
    %244 = vector.load %arg6[%c0_56, %c0_57] : memref<1x128xf32, #tpu.memory_space<vmem>>, vector<1x128xf32>
    %cst_58 = arith.constant dense<0.000000e+00> : vector<16x128xf32>
    %245 = tpu.matmul %241, %242, %cst_58 {dimension_numbers = #tpu.dot_dimension_numbers<[1], [0], [0], [1], [0, 0, 1, 1], [], []>} : vector<16x32xf32>, vector<32x128xf32>, vector<16x128xf32> -> vector<16x128xf32>
    %246 = vector.broadcast %244 : vector<1x128xf32> to vector<16x128xf32>
    %247 = arith.addf %245, %246 : vector<16x128xf32>
    %cst_59 = arith.constant 0.000000e+00 : f32
    %248 = vector.broadcast %cst_59 : f32 to vector<2x32xf32>
    %cst_60 = arith.constant 0.000000e+00 : f32
    %249 = vector.broadcast %cst_60 : f32 to vector<2x32xf32>
    %250 = vector.extract_strided_slice %247 {offsets = [0, 0], sizes = [2, 128], strides = [1, 1]} : vector<16x128xf32> to vector<2x128xf32>
    %cst_61 = arith.constant dense<0.000000e+00> : vector<2x128xf32>
    %251 = tpu.matmul %248, %243, %cst_61 {dimension_numbers = #tpu.dot_dimension_numbers<[1], [0], [0], [1], [0, 0, 1, 1], [], []>} : vector<2x32xf32>, vector<32x128xf32>, vector<2x128xf32> -> vector<2x128xf32>
    %252 = arith.addf %250, %251 : vector<2x128xf32>
    %253 = vector.extract_strided_slice %252 {offsets = [0, 0], sizes = [2, 32], strides = [1, 1]} : vector<2x128xf32> to vector<2x32xf32>
    %254 = arith.negf %253 : vector<2x32xf32>
    %255 = math.exp %254 : vector<2x32xf32>
    %cst_62 = arith.constant 1.000000e+00 : f32
    %256 = vector.broadcast %cst_62 : f32 to vector<2x32xf32>
    %257 = arith.addf %256, %255 : vector<2x32xf32>
    %258 = arith.divf %256, %257 : vector<2x32xf32>
    %259 = vector.extract_strided_slice %252 {offsets = [0, 32], sizes = [2, 32], strides = [1, 1]} : vector<2x128xf32> to vector<2x32xf32>
    %260 = arith.negf %259 : vector<2x32xf32>
    %261 = math.exp %260 : vector<2x32xf32>
    %cst_63 = arith.constant 1.000000e+00 : f32
    %262 = vector.broadcast %cst_63 : f32 to vector<2x32xf32>
    %263 = arith.addf %262, %261 : vector<2x32xf32>
    %264 = arith.divf %262, %263 : vector<2x32xf32>
    %265 = vector.extract_strided_slice %252 {offsets = [0, 64], sizes = [2, 32], strides = [1, 1]} : vector<2x128xf32> to vector<2x32xf32>
    %266 = math.tanh %265 : vector<2x32xf32>
    %267 = vector.extract_strided_slice %252 {offsets = [0, 96], sizes = [2, 32], strides = [1, 1]} : vector<2x128xf32> to vector<2x32xf32>
    %268 = arith.negf %267 : vector<2x32xf32>
    %269 = math.exp %268 : vector<2x32xf32>
    %cst_64 = arith.constant 1.000000e+00 : f32
    %270 = vector.broadcast %cst_64 : f32 to vector<2x32xf32>
    %271 = arith.addf %270, %269 : vector<2x32xf32>
    %272 = arith.divf %270, %271 : vector<2x32xf32>
    %273 = arith.mulf %264, %249 : vector<2x32xf32>
    %274 = arith.mulf %258, %266 : vector<2x32xf32>
    %275 = arith.addf %273, %274 : vector<2x32xf32>
    %276 = math.tanh %275 : vector<2x32xf32>
    %277 = arith.mulf %272, %276 : vector<2x32xf32>
    %278 = vector.extract_strided_slice %247 {offsets = [2, 0], sizes = [2, 128], strides = [1, 1]} : vector<16x128xf32> to vector<2x128xf32>
    %cst_65 = arith.constant dense<0.000000e+00> : vector<2x128xf32>
    %279 = tpu.matmul %277, %243, %cst_65 {dimension_numbers = #tpu.dot_dimension_numbers<[1], [0], [0], [1], [0, 0, 1, 1], [], []>} : vector<2x32xf32>, vector<32x128xf32>, vector<2x128xf32> -> vector<2x128xf32>
    %280 = arith.addf %278, %279 : vector<2x128xf32>
    %281 = vector.extract_strided_slice %280 {offsets = [0, 0], sizes = [2, 32], strides = [1, 1]} : vector<2x128xf32> to vector<2x32xf32>
    %282 = arith.negf %281 : vector<2x32xf32>
    %283 = math.exp %282 : vector<2x32xf32>
    %cst_66 = arith.constant 1.000000e+00 : f32
    %284 = vector.broadcast %cst_66 : f32 to vector<2x32xf32>
    %285 = arith.addf %284, %283 : vector<2x32xf32>
    %286 = arith.divf %284, %285 : vector<2x32xf32>
    %287 = vector.extract_strided_slice %280 {offsets = [0, 32], sizes = [2, 32], strides = [1, 1]} : vector<2x128xf32> to vector<2x32xf32>
    %288 = arith.negf %287 : vector<2x32xf32>
    %289 = math.exp %288 : vector<2x32xf32>
    %cst_67 = arith.constant 1.000000e+00 : f32
    %290 = vector.broadcast %cst_67 : f32 to vector<2x32xf32>
    %291 = arith.addf %290, %289 : vector<2x32xf32>
    %292 = arith.divf %290, %291 : vector<2x32xf32>
    %293 = vector.extract_strided_slice %280 {offsets = [0, 64], sizes = [2, 32], strides = [1, 1]} : vector<2x128xf32> to vector<2x32xf32>
    %294 = math.tanh %293 : vector<2x32xf32>
    %295 = vector.extract_strided_slice %280 {offsets = [0, 96], sizes = [2, 32], strides = [1, 1]} : vector<2x128xf32> to vector<2x32xf32>
    %296 = arith.negf %295 : vector<2x32xf32>
    %297 = math.exp %296 : vector<2x32xf32>
    %cst_68 = arith.constant 1.000000e+00 : f32
    %298 = vector.broadcast %cst_68 : f32 to vector<2x32xf32>
    %299 = arith.addf %298, %297 : vector<2x32xf32>
    %300 = arith.divf %298, %299 : vector<2x32xf32>
    %301 = arith.mulf %292, %275 : vector<2x32xf32>
    %302 = arith.mulf %286, %294 : vector<2x32xf32>
    %303 = arith.addf %301, %302 : vector<2x32xf32>
    %304 = math.tanh %303 : vector<2x32xf32>
    %305 = arith.mulf %300, %304 : vector<2x32xf32>
    %306 = vector.extract_strided_slice %247 {offsets = [4, 0], sizes = [2, 128], strides = [1, 1]} : vector<16x128xf32> to vector<2x128xf32>
    %cst_69 = arith.constant dense<0.000000e+00> : vector<2x128xf32>
    %307 = tpu.matmul %305, %243, %cst_69 {dimension_numbers = #tpu.dot_dimension_numbers<[1], [0], [0], [1], [0, 0, 1, 1], [], []>} : vector<2x32xf32>, vector<32x128xf32>, vector<2x128xf32> -> vector<2x128xf32>
    %308 = arith.addf %306, %307 : vector<2x128xf32>
    %309 = vector.extract_strided_slice %308 {offsets = [0, 0], sizes = [2, 32], strides = [1, 1]} : vector<2x128xf32> to vector<2x32xf32>
    %310 = arith.negf %309 : vector<2x32xf32>
    %311 = math.exp %310 : vector<2x32xf32>
    %cst_70 = arith.constant 1.000000e+00 : f32
    %312 = vector.broadcast %cst_70 : f32 to vector<2x32xf32>
    %313 = arith.addf %312, %311 : vector<2x32xf32>
    %314 = arith.divf %312, %313 : vector<2x32xf32>
    %315 = vector.extract_strided_slice %308 {offsets = [0, 32], sizes = [2, 32], strides = [1, 1]} : vector<2x128xf32> to vector<2x32xf32>
    %316 = arith.negf %315 : vector<2x32xf32>
    %317 = math.exp %316 : vector<2x32xf32>
    %cst_71 = arith.constant 1.000000e+00 : f32
    %318 = vector.broadcast %cst_71 : f32 to vector<2x32xf32>
    %319 = arith.addf %318, %317 : vector<2x32xf32>
    %320 = arith.divf %318, %319 : vector<2x32xf32>
    %321 = vector.extract_strided_slice %308 {offsets = [0, 64], sizes = [2, 32], strides = [1, 1]} : vector<2x128xf32> to vector<2x32xf32>
    %322 = math.tanh %321 : vector<2x32xf32>
    %323 = vector.extract_strided_slice %308 {offsets = [0, 96], sizes = [2, 32], strides = [1, 1]} : vector<2x128xf32> to vector<2x32xf32>
    %324 = arith.negf %323 : vector<2x32xf32>
    %325 = math.exp %324 : vector<2x32xf32>
    %cst_72 = arith.constant 1.000000e+00 : f32
    %326 = vector.broadcast %cst_72 : f32 to vector<2x32xf32>
    %327 = arith.addf %326, %325 : vector<2x32xf32>
    %328 = arith.divf %326, %327 : vector<2x32xf32>
    %329 = arith.mulf %320, %303 : vector<2x32xf32>
    %330 = arith.mulf %314, %322 : vector<2x32xf32>
    %331 = arith.addf %329, %330 : vector<2x32xf32>
    %332 = math.tanh %331 : vector<2x32xf32>
    %333 = arith.mulf %328, %332 : vector<2x32xf32>
    %334 = vector.extract_strided_slice %247 {offsets = [6, 0], sizes = [2, 128], strides = [1, 1]} : vector<16x128xf32> to vector<2x128xf32>
    %cst_73 = arith.constant dense<0.000000e+00> : vector<2x128xf32>
    %335 = tpu.matmul %333, %243, %cst_73 {dimension_numbers = #tpu.dot_dimension_numbers<[1], [0], [0], [1], [0, 0, 1, 1], [], []>} : vector<2x32xf32>, vector<32x128xf32>, vector<2x128xf32> -> vector<2x128xf32>
    %336 = arith.addf %334, %335 : vector<2x128xf32>
    %337 = vector.extract_strided_slice %336 {offsets = [0, 0], sizes = [2, 32], strides = [1, 1]} : vector<2x128xf32> to vector<2x32xf32>
    %338 = arith.negf %337 : vector<2x32xf32>
    %339 = math.exp %338 : vector<2x32xf32>
    %cst_74 = arith.constant 1.000000e+00 : f32
    %340 = vector.broadcast %cst_74 : f32 to vector<2x32xf32>
    %341 = arith.addf %340, %339 : vector<2x32xf32>
    %342 = arith.divf %340, %341 : vector<2x32xf32>
    %343 = vector.extract_strided_slice %336 {offsets = [0, 32], sizes = [2, 32], strides = [1, 1]} : vector<2x128xf32> to vector<2x32xf32>
    %344 = arith.negf %343 : vector<2x32xf32>
    %345 = math.exp %344 : vector<2x32xf32>
    %cst_75 = arith.constant 1.000000e+00 : f32
    %346 = vector.broadcast %cst_75 : f32 to vector<2x32xf32>
    %347 = arith.addf %346, %345 : vector<2x32xf32>
    %348 = arith.divf %346, %347 : vector<2x32xf32>
    %349 = vector.extract_strided_slice %336 {offsets = [0, 64], sizes = [2, 32], strides = [1, 1]} : vector<2x128xf32> to vector<2x32xf32>
    %350 = math.tanh %349 : vector<2x32xf32>
    %351 = vector.extract_strided_slice %336 {offsets = [0, 96], sizes = [2, 32], strides = [1, 1]} : vector<2x128xf32> to vector<2x32xf32>
    %352 = arith.negf %351 : vector<2x32xf32>
    %353 = math.exp %352 : vector<2x32xf32>
    %cst_76 = arith.constant 1.000000e+00 : f32
    %354 = vector.broadcast %cst_76 : f32 to vector<2x32xf32>
    %355 = arith.addf %354, %353 : vector<2x32xf32>
    %356 = arith.divf %354, %355 : vector<2x32xf32>
    %357 = arith.mulf %348, %331 : vector<2x32xf32>
    %358 = arith.mulf %342, %350 : vector<2x32xf32>
    %359 = arith.addf %357, %358 : vector<2x32xf32>
    %360 = math.tanh %359 : vector<2x32xf32>
    %361 = arith.mulf %356, %360 : vector<2x32xf32>
    %362 = vector.extract_strided_slice %247 {offsets = [8, 0], sizes = [2, 128], strides = [1, 1]} : vector<16x128xf32> to vector<2x128xf32>
    %cst_77 = arith.constant dense<0.000000e+00> : vector<2x128xf32>
    %363 = tpu.matmul %361, %243, %cst_77 {dimension_numbers = #tpu.dot_dimension_numbers<[1], [0], [0], [1], [0, 0, 1, 1], [], []>} : vector<2x32xf32>, vector<32x128xf32>, vector<2x128xf32> -> vector<2x128xf32>
    %364 = arith.addf %362, %363 : vector<2x128xf32>
    %365 = vector.extract_strided_slice %364 {offsets = [0, 0], sizes = [2, 32], strides = [1, 1]} : vector<2x128xf32> to vector<2x32xf32>
    %366 = arith.negf %365 : vector<2x32xf32>
    %367 = math.exp %366 : vector<2x32xf32>
    %cst_78 = arith.constant 1.000000e+00 : f32
    %368 = vector.broadcast %cst_78 : f32 to vector<2x32xf32>
    %369 = arith.addf %368, %367 : vector<2x32xf32>
    %370 = arith.divf %368, %369 : vector<2x32xf32>
    %371 = vector.extract_strided_slice %364 {offsets = [0, 32], sizes = [2, 32], strides = [1, 1]} : vector<2x128xf32> to vector<2x32xf32>
    %372 = arith.negf %371 : vector<2x32xf32>
    %373 = math.exp %372 : vector<2x32xf32>
    %cst_79 = arith.constant 1.000000e+00 : f32
    %374 = vector.broadcast %cst_79 : f32 to vector<2x32xf32>
    %375 = arith.addf %374, %373 : vector<2x32xf32>
    %376 = arith.divf %374, %375 : vector<2x32xf32>
    %377 = vector.extract_strided_slice %364 {offsets = [0, 64], sizes = [2, 32], strides = [1, 1]} : vector<2x128xf32> to vector<2x32xf32>
    %378 = math.tanh %377 : vector<2x32xf32>
    %379 = vector.extract_strided_slice %364 {offsets = [0, 96], sizes = [2, 32], strides = [1, 1]} : vector<2x128xf32> to vector<2x32xf32>
    %380 = arith.negf %379 : vector<2x32xf32>
    %381 = math.exp %380 : vector<2x32xf32>
    %cst_80 = arith.constant 1.000000e+00 : f32
    %382 = vector.broadcast %cst_80 : f32 to vector<2x32xf32>
    %383 = arith.addf %382, %381 : vector<2x32xf32>
    %384 = arith.divf %382, %383 : vector<2x32xf32>
    %385 = arith.mulf %376, %359 : vector<2x32xf32>
    %386 = arith.mulf %370, %378 : vector<2x32xf32>
    %387 = arith.addf %385, %386 : vector<2x32xf32>
    %388 = math.tanh %387 : vector<2x32xf32>
    %389 = arith.mulf %384, %388 : vector<2x32xf32>
    %390 = vector.extract_strided_slice %247 {offsets = [10, 0], sizes = [2, 128], strides = [1, 1]} : vector<16x128xf32> to vector<2x128xf32>
    %cst_81 = arith.constant dense<0.000000e+00> : vector<2x128xf32>
    %391 = tpu.matmul %389, %243, %cst_81 {dimension_numbers = #tpu.dot_dimension_numbers<[1], [0], [0], [1], [0, 0, 1, 1], [], []>} : vector<2x32xf32>, vector<32x128xf32>, vector<2x128xf32> -> vector<2x128xf32>
    %392 = arith.addf %390, %391 : vector<2x128xf32>
    %393 = vector.extract_strided_slice %392 {offsets = [0, 0], sizes = [2, 32], strides = [1, 1]} : vector<2x128xf32> to vector<2x32xf32>
    %394 = arith.negf %393 : vector<2x32xf32>
    %395 = math.exp %394 : vector<2x32xf32>
    %cst_82 = arith.constant 1.000000e+00 : f32
    %396 = vector.broadcast %cst_82 : f32 to vector<2x32xf32>
    %397 = arith.addf %396, %395 : vector<2x32xf32>
    %398 = arith.divf %396, %397 : vector<2x32xf32>
    %399 = vector.extract_strided_slice %392 {offsets = [0, 32], sizes = [2, 32], strides = [1, 1]} : vector<2x128xf32> to vector<2x32xf32>
    %400 = arith.negf %399 : vector<2x32xf32>
    %401 = math.exp %400 : vector<2x32xf32>
    %cst_83 = arith.constant 1.000000e+00 : f32
    %402 = vector.broadcast %cst_83 : f32 to vector<2x32xf32>
    %403 = arith.addf %402, %401 : vector<2x32xf32>
    %404 = arith.divf %402, %403 : vector<2x32xf32>
    %405 = vector.extract_strided_slice %392 {offsets = [0, 64], sizes = [2, 32], strides = [1, 1]} : vector<2x128xf32> to vector<2x32xf32>
    %406 = math.tanh %405 : vector<2x32xf32>
    %407 = vector.extract_strided_slice %392 {offsets = [0, 96], sizes = [2, 32], strides = [1, 1]} : vector<2x128xf32> to vector<2x32xf32>
    %408 = arith.negf %407 : vector<2x32xf32>
    %409 = math.exp %408 : vector<2x32xf32>
    %cst_84 = arith.constant 1.000000e+00 : f32
    %410 = vector.broadcast %cst_84 : f32 to vector<2x32xf32>
    %411 = arith.addf %410, %409 : vector<2x32xf32>
    %412 = arith.divf %410, %411 : vector<2x32xf32>
    %413 = arith.mulf %404, %387 : vector<2x32xf32>
    %414 = arith.mulf %398, %406 : vector<2x32xf32>
    %415 = arith.addf %413, %414 : vector<2x32xf32>
    %416 = math.tanh %415 : vector<2x32xf32>
    %417 = arith.mulf %412, %416 : vector<2x32xf32>
    %418 = vector.extract_strided_slice %247 {offsets = [12, 0], sizes = [2, 128], strides = [1, 1]} : vector<16x128xf32> to vector<2x128xf32>
    %cst_85 = arith.constant dense<0.000000e+00> : vector<2x128xf32>
    %419 = tpu.matmul %417, %243, %cst_85 {dimension_numbers = #tpu.dot_dimension_numbers<[1], [0], [0], [1], [0, 0, 1, 1], [], []>} : vector<2x32xf32>, vector<32x128xf32>, vector<2x128xf32> -> vector<2x128xf32>
    %420 = arith.addf %418, %419 : vector<2x128xf32>
    %421 = vector.extract_strided_slice %420 {offsets = [0, 0], sizes = [2, 32], strides = [1, 1]} : vector<2x128xf32> to vector<2x32xf32>
    %422 = arith.negf %421 : vector<2x32xf32>
    %423 = math.exp %422 : vector<2x32xf32>
    %cst_86 = arith.constant 1.000000e+00 : f32
    %424 = vector.broadcast %cst_86 : f32 to vector<2x32xf32>
    %425 = arith.addf %424, %423 : vector<2x32xf32>
    %426 = arith.divf %424, %425 : vector<2x32xf32>
    %427 = vector.extract_strided_slice %420 {offsets = [0, 32], sizes = [2, 32], strides = [1, 1]} : vector<2x128xf32> to vector<2x32xf32>
    %428 = arith.negf %427 : vector<2x32xf32>
    %429 = math.exp %428 : vector<2x32xf32>
    %cst_87 = arith.constant 1.000000e+00 : f32
    %430 = vector.broadcast %cst_87 : f32 to vector<2x32xf32>
    %431 = arith.addf %430, %429 : vector<2x32xf32>
    %432 = arith.divf %430, %431 : vector<2x32xf32>
    %433 = vector.extract_strided_slice %420 {offsets = [0, 64], sizes = [2, 32], strides = [1, 1]} : vector<2x128xf32> to vector<2x32xf32>
    %434 = math.tanh %433 : vector<2x32xf32>
    %435 = vector.extract_strided_slice %420 {offsets = [0, 96], sizes = [2, 32], strides = [1, 1]} : vector<2x128xf32> to vector<2x32xf32>
    %436 = arith.negf %435 : vector<2x32xf32>
    %437 = math.exp %436 : vector<2x32xf32>
    %cst_88 = arith.constant 1.000000e+00 : f32
    %438 = vector.broadcast %cst_88 : f32 to vector<2x32xf32>
    %439 = arith.addf %438, %437 : vector<2x32xf32>
    %440 = arith.divf %438, %439 : vector<2x32xf32>
    %441 = arith.mulf %432, %415 : vector<2x32xf32>
    %442 = arith.mulf %426, %434 : vector<2x32xf32>
    %443 = arith.addf %441, %442 : vector<2x32xf32>
    %444 = math.tanh %443 : vector<2x32xf32>
    %445 = arith.mulf %440, %444 : vector<2x32xf32>
    %446 = vector.extract_strided_slice %247 {offsets = [14, 0], sizes = [2, 128], strides = [1, 1]} : vector<16x128xf32> to vector<2x128xf32>
    %cst_89 = arith.constant dense<0.000000e+00> : vector<2x128xf32>
    %447 = tpu.matmul %445, %243, %cst_89 {dimension_numbers = #tpu.dot_dimension_numbers<[1], [0], [0], [1], [0, 0, 1, 1], [], []>} : vector<2x32xf32>, vector<32x128xf32>, vector<2x128xf32> -> vector<2x128xf32>
    %448 = arith.addf %446, %447 : vector<2x128xf32>
    %449 = vector.extract_strided_slice %448 {offsets = [0, 0], sizes = [2, 32], strides = [1, 1]} : vector<2x128xf32> to vector<2x32xf32>
    %450 = arith.negf %449 : vector<2x32xf32>
    %451 = math.exp %450 : vector<2x32xf32>
    %cst_90 = arith.constant 1.000000e+00 : f32
    %452 = vector.broadcast %cst_90 : f32 to vector<2x32xf32>
    %453 = arith.addf %452, %451 : vector<2x32xf32>
    %454 = arith.divf %452, %453 : vector<2x32xf32>
    %455 = vector.extract_strided_slice %448 {offsets = [0, 32], sizes = [2, 32], strides = [1, 1]} : vector<2x128xf32> to vector<2x32xf32>
    %456 = arith.negf %455 : vector<2x32xf32>
    %457 = math.exp %456 : vector<2x32xf32>
    %cst_91 = arith.constant 1.000000e+00 : f32
    %458 = vector.broadcast %cst_91 : f32 to vector<2x32xf32>
    %459 = arith.addf %458, %457 : vector<2x32xf32>
    %460 = arith.divf %458, %459 : vector<2x32xf32>
    %461 = vector.extract_strided_slice %448 {offsets = [0, 64], sizes = [2, 32], strides = [1, 1]} : vector<2x128xf32> to vector<2x32xf32>
    %462 = math.tanh %461 : vector<2x32xf32>
    %463 = vector.extract_strided_slice %448 {offsets = [0, 96], sizes = [2, 32], strides = [1, 1]} : vector<2x128xf32> to vector<2x32xf32>
    %464 = arith.negf %463 : vector<2x32xf32>
    %465 = math.exp %464 : vector<2x32xf32>
    %cst_92 = arith.constant 1.000000e+00 : f32
    %466 = vector.broadcast %cst_92 : f32 to vector<2x32xf32>
    %467 = arith.addf %466, %465 : vector<2x32xf32>
    %468 = arith.divf %466, %467 : vector<2x32xf32>
    %469 = arith.mulf %460, %443 : vector<2x32xf32>
    %470 = arith.mulf %454, %462 : vector<2x32xf32>
    %471 = arith.addf %469, %470 : vector<2x32xf32>
    %472 = math.tanh %471 : vector<2x32xf32>
    %473 = arith.mulf %468, %472 : vector<2x32xf32>
    %c0_93 = arith.constant 0 : index
    %c0_94 = arith.constant 0 : index
    %474 = vector.load %arg7[%c0_93, %c0_94] : memref<32x3xf32, #tpu.memory_space<vmem>>, vector<32x3xf32>
    %cst_95 = arith.constant dense<0.000000e+00> : vector<2x3xf32>
    %475 = tpu.matmul %473, %474, %cst_95 {dimension_numbers = #tpu.dot_dimension_numbers<[1], [0], [0], [1], [0, 0, 1, 1], [], []>} : vector<2x32xf32>, vector<32x3xf32>, vector<2x3xf32> -> vector<2x3xf32>
    %c0_96 = arith.constant 0 : index
    %c0_97 = arith.constant 0 : index
    %476 = vector.load %arg8[%c0_96, %c0_97] : memref<1x3xf32, #tpu.memory_space<vmem>>, vector<1x3xf32>
    %477 = vector.broadcast %476 : vector<1x3xf32> to vector<2x3xf32>
    %478 = arith.addf %475, %477 : vector<2x3xf32>
    %c0_98 = arith.constant 0 : index
    %c0_99 = arith.constant 0 : index
    %479 = vector.load %arg9[%c0_98, %c0_99] : memref<2x3xf32, #tpu.memory_space<vmem>>, vector<2x3xf32>
    tpu.vector_store %arg9[%c0_98, %c0_99], %478 {strides = array<i32>} : memref<2x3xf32, #tpu.memory_space<vmem>>, vector<2x3xf32>,
    return
  }
}

</mosaic_0001>

<llo_original>
// kernel: tpu_custom_call.1
$region0: #{tpu_custom_call.1}
  #allocation0 [shape = 'u32[]', space=smem, size = 0x4, offset = 0x4, fixed_abs, tag = 'smem constant byte address 0x4 - core index']
  #allocation1 [shape = 'u32[144,128]{1,0:T(1,128)}', space=vmem, size = 0x12000, scoped, tag = 'internal scratch']
  #allocation2 [shape = 'f32[16,32]{1,0:T(8,128)}', space=vmem, size = 0x2000, scoped, tag = 'scratch operand']
  %s0 = inlined_call_operand.vmem [shape: f32[16,4], index: 0, kind: input, shape index: {}]
  %s1 = inlined_call_operand.hbm [shape: f32[4,128], index: 1, kind: input, shape index: {}]
  %s2 = inlined_call_operand.vmem [shape: f32[32,128], index: 2, kind: input, shape index: {}]
  %s3 = inlined_call_operand.hbm [shape: f32[1,128], index: 3, kind: input, shape index: {}]
  %s4 = inlined_call_operand.hbm [shape: f32[32,128], index: 4, kind: input, shape index: {}]
  %s5 = inlined_call_operand.vmem [shape: f32[32,128], index: 5, kind: input, shape index: {}]
  %s6 = inlined_call_operand.hbm [shape: f32[1,128], index: 6, kind: input, shape index: {}]
  %s7 = inlined_call_operand.vmem [shape: f32[32,3], index: 7, kind: input, shape index: {}]
  %s8 = inlined_call_operand.vmem [shape: f32[1,3], index: 8, kind: input, shape index: {}]
  %s9 = inlined_call_operand.hbm [shape: f32[2,3], index: 9, kind: output, shape index: {}]
  %s10 = sld [smem:[#allocation0]]
  $region62: #{tpu_custom_call.1} parent=0
    _
  %s12 = ssub.s32 1, %s10
  %s13 = scalar_select 0, %s12, %s10
  $region1: #{tpu_custom_call.1} parent=0
    #allocation3 [shape = 'u8[2048]{0}', space=vmem, size = 0x800, scoped, tag = 'input window, operand 1, single buffered']
    #allocation4 [shape = 's32[1]{0}', space=sflag, size = 0x4, scoped, tag = 'scoped memory for tpu_custom_call.1']
    #allocation5 [shape = 's32[1]{0}', space=sflag, size = 0x4, scoped, tag = 'scoped memory for tpu_custom_call.1']
    #allocation6 [shape = 'u8[512]{0}', space=vmem, size = 0x400, scoped, tag = 'input window, operand 3, single buffered']
    #allocation7 [shape = 's32[1]{0}', space=sflag, size = 0x4, scoped, tag = 'scoped memory for tpu_custom_call.1']
    #allocation8 [shape = 'u8[16384]{0}', space=vmem, size = 0x4000, scoped, tag = 'input window, operand 4, single buffered']
    #allocation9 [shape = 'u8[512]{0}', space=vmem, size = 0x400, scoped, tag = 'input window, operand 6, single buffered']
    #allocation10 [shape = 's32[1]{0}', space=sflag, size = 0x4, scoped, tag = 'scoped memory for tpu_custom_call.1']
    #allocation11 [shape = 'u8[1024]{0}', space=vmem, size = 0x400, scoped, tag = 'output window, operand 0, single buffered']
    %14 = vsyncpa [#allocation4], 0
    %15 = vsyncpa [#allocation7], 0
    %16 = vsyncpa [#allocation10], 0
    %17 = vsyncpa [#allocation5], 0
    // Predicated region
    $region2: #{tpu_custom_call.1} parent=1 // pred_check
      _
    $region3: #{tpu_custom_call.1} parent=1 // pred_check_branch
      %19 = sbr.rel (0) target = $region5
    $region4: #{tpu_custom_call.1} parent=1 // pred_region
      _
    $region5: #{tpu_custom_call.1} parent=1 // pred_fallthru
      _
    // Predicated region
    $region6: #{tpu_custom_call.1} parent=1 // pred_check
      _
    $region7: #{tpu_custom_call.1} parent=1 // pred_check_branch
      %21 = sbr.rel (0) target = $region9
    $region8: #{tpu_custom_call.1} parent=1 // pred_region
      %s23 = ssub.s32 64, 64
      %24 = vsyncadd [#allocation4], %s23
      %s26 = sshll.u32 [#allocation3], 4
      %s27 = int_to_ptr.vmem [resolvable:$true] %s26
      %29 = dma.hbm_to_vmem [thread:$0]  %s1, 64, %s27, [#allocation4]
    $region9: #{tpu_custom_call.1} parent=1 // pred_fallthru
      _
    // Predicated region
    $region10: #{tpu_custom_call.1} parent=1 // pred_check
      _
    $region11: #{tpu_custom_call.1} parent=1 // pred_check_branch
      %31 = sbr.rel (0) target = $region13
    $region12: #{tpu_custom_call.1} parent=1 // pred_region
      _
    $region13: #{tpu_custom_call.1} parent=1 // pred_fallthru
      _
    // Predicated region
    $region14: #{tpu_custom_call.1} parent=1 // pred_check
      _
    $region15: #{tpu_custom_call.1} parent=1 // pred_check_branch
      %33 = sbr.rel (0) target = $region17
    $region16: #{tpu_custom_call.1} parent=1 // pred_region
      %s35 = ssub.s32 16, 16
      %36 = vsyncadd [#allocation7], %s35
      %s38 = sshll.u32 [#allocation6], 4
      %s39 = int_to_ptr.vmem [resolvable:$true] %s38
      %41 = dma.hbm_to_vmem [thread:$0]  %s3, 16, %s39, [#allocation7]
    $region17: #{tpu_custom_call.1} parent=1 // pred_fallthru
      _
    // Predicated region
    $region18: #{tpu_custom_call.1} parent=1 // pred_check
      _
    $region19: #{tpu_custom_call.1} parent=1 // pred_check_branch
      %43 = sbr.rel (0) target = $region21
    $region20: #{tpu_custom_call.1} parent=1 // pred_region
      %s45 = ssub.s32 512, 512
      %46 = vsyncadd [#allocation7], %s45
      %s47 = sshll.u32 [#allocation8], 4
      %s48 = int_to_ptr.vmem [resolvable:$true] %s47
      %53 = dma.hbm_to_vmem [thread:$0]  %s4, 512, %s48, [#allocation7], 128, 128, 8
    $region21: #{tpu_custom_call.1} parent=1 // pred_fallthru
      _
    // Predicated region
    $region22: #{tpu_custom_call.1} parent=1 // pred_check
      _
    $region23: #{tpu_custom_call.1} parent=1 // pred_check_branch
      %55 = sbr.rel (0) target = $region25
    $region24: #{tpu_custom_call.1} parent=1 // pred_region
      _
    $region25: #{tpu_custom_call.1} parent=1 // pred_fallthru
      _
    // Predicated region
    $region26: #{tpu_custom_call.1} parent=1 // pred_check
      _
    $region27: #{tpu_custom_call.1} parent=1 // pred_check_branch
      %57 = sbr.rel (0) target = $region29
    $region28: #{tpu_custom_call.1} parent=1 // pred_region
      %s59 = ssub.s32 16, 16
      %60 = vsyncadd [#allocation10], %s59
      %s62 = sshll.u32 [#allocation9], 4
      %s63 = int_to_ptr.vmem [resolvable:$true] %s62
      %65 = dma.hbm_to_vmem [thread:$0]  %s6, 16, %s63, [#allocation10]
    $region29: #{tpu_custom_call.1} parent=1 // pred_fallthru
      _
    // Predicated region
    $region30: #{tpu_custom_call.1} parent=1 // pred_check
      _
    $region31: #{tpu_custom_call.1} parent=1 // pred_check_branch
      %67 = sbr.rel (0) target = $region33
    $region32: #{tpu_custom_call.1} parent=1 // pred_region
      _
    $region33: #{tpu_custom_call.1} parent=1 // pred_fallthru
      _
    // Predicated region
    $region34: #{tpu_custom_call.1} parent=1 // pred_check
      _
    $region35: #{tpu_custom_call.1} parent=1 // pred_check_branch
      %69 = sbr.rel (0) target = $region37
    $region36: #{tpu_custom_call.1} parent=1 // pred_region
      _
    $region37: #{tpu_custom_call.1} parent=1 // pred_fallthru
      _
    // Predicated region
    $region38: #{tpu_custom_call.1} parent=1 // pred_check
      _
    $region39: #{tpu_custom_call.1} parent=1 // pred_check_branch
      %71 = sbr.rel (0) target = $region41
    $region40: #{tpu_custom_call.1} parent=1 // pred_region
      %72 = dma.done [#allocation4], 64
    $region41: #{tpu_custom_call.1} parent=1 // pred_fallthru
      _
    // Predicated region
    $region42: #{tpu_custom_call.1} parent=1 // pred_check
      _
    $region43: #{tpu_custom_call.1} parent=1 // pred_check_branch
      %74 = sbr.rel (0) target = $region45
    $region44: #{tpu_custom_call.1} parent=1 // pred_region
      %75 = dma.done [#allocation7], 16
    $region45: #{tpu_custom_call.1} parent=1 // pred_fallthru
      _
    // Predicated region
    $region46: #{tpu_custom_call.1} parent=1 // pred_check
      _
    $region47: #{tpu_custom_call.1} parent=1 // pred_check_branch
      %77 = sbr.rel (0) target = $region49
    $region48: #{tpu_custom_call.1} parent=1 // pred_region
      %78 = dma.done [#allocation7], 512
    $region49: #{tpu_custom_call.1} parent=1 // pred_fallthru
      _
    // Predicated region
    $region50: #{tpu_custom_call.1} parent=1 // pred_check
      _
    $region51: #{tpu_custom_call.1} parent=1 // pred_check_branch
      %80 = sbr.rel (0) target = $region53
    $region52: #{tpu_custom_call.1} parent=1 // pred_region
      %81 = dma.done [#allocation10], 16
    $region53: #{tpu_custom_call.1} parent=1 // pred_fallthru
      _
    %v82 = vld [vmem:[%s0] sm:$0xff]
    %v83 = vld [vmem:[%s0 + $0x8] sm:$0xff]
    %v84 = vld [vmem:[#allocation3] sm:$0xf]
    %v85 = vld [vmem:[%s2] sm:$0xff]
    %v86 = vld [vmem:[%s2 + $0x8] sm:$0xff]
    %v87 = vld [vmem:[%s2 + $0x10] sm:$0xff]
    %v88 = vld [vmem:[%s2 + $0x18] sm:$0xff]
    %v89 = vld [vmem:[#allocation6] sm:$0x1]
    %v91 = vlaneseq
    %v92 = vshrl.u32 %v91, 7
    %v93 = vsub.s32 0, %v92
    %v94 = vrot.slane %v89, %v93
    %vm96 = vcmask 31744
    %v98 = vsel %vm96, %v82, 0
    %v101 = vsel %vm96, %v83, 0
    %vm103 = vcmask 1043456
    %v105 = vsel %vm103, %v84, 0
    %107 = vmatprep.subr.mxu0 0.0
    %108 = vmatpush1.msra.mxu0 0.0
    %109 = vmatprep.subr.mxu0 0.0
    %110 = vmatpush1.msra.mxu0 0.0
    %111 = vmatprep.subr.mxu0 0.0
    %112 = vmatpush1.msra.mxu0 0.0
    %113 = vmatprep.subr.mxu0 0.0
    %114 = vmatpush1.msra.mxu0 0.0
    %115 = vmatprep.subr.mxu0 0.0
    %116 = vmatpush1.msra.mxu0 0.0
    %117 = vmatprep.subr.mxu0 0.0
    %118 = vmatpush1.msra.mxu0 0.0
    %119 = vmatprep.subr.mxu0 0.0
    %120 = vmatpush1.msra.mxu0 0.0
    %121 = vmatprep.subr.mxu0 0.0
    %122 = vmatpush1.msra.mxu0 0.0
    %123 = vmatprep.subr.mxu0 0.0
    %124 = vmatpush1.msra.mxu0 0.0
    %125 = vmatprep.subr.mxu0 0.0
    %126 = vmatpush1.msra.mxu0 0.0
    %127 = vmatprep.subr.mxu0 0.0
    %128 = vmatpush1.msra.mxu0 0.0
    %129 = vmatprep.subr.mxu0 0.0
    %130 = vmatpush1.msra.mxu0 0.0
    %131 = vmatprep.subr.mxu0 0.0
    %132 = vmatpush1.msra.mxu0 0.0
    %133 = vmatprep.subr.mxu0 0.0
    %134 = vmatpush1.msra.mxu0 0.0
    %135 = vmatprep.subr.mxu0 0.0
    %136 = vmatpush1.msra.mxu0 0.0
    %137 = vmatprep.subr.mxu0 0.0
    %138 = vmatpush1.msra.mxu0 %v105
    %139 = vmatprep.subr.mxu0 0.0
    %140 = vmatpush2.msra.mxu0 0.0
    %141 = vmatprep.subr.mxu0 0.0
    %142 = vmatpush2.msra.mxu0 0.0
    %143 = vmatprep.subr.mxu0 0.0
    %144 = vmatpush2.msra.mxu0 0.0
    %145 = vmatprep.subr.mxu0 0.0
    %146 = vmatpush2.msra.mxu0 0.0
    %147 = vmatprep.subr.mxu0 0.0
    %148 = vmatpush2.msra.mxu0 0.0
    %149 = vmatprep.subr.mxu0 0.0
    %150 = vmatpush2.msra.mxu0 0.0
    %151 = vmatprep.subr.mxu0 0.0
    %152 = vmatpush2.msra.mxu0 0.0
    %153 = vmatprep.subr.mxu0 0.0
    %154 = vmatpush2.msra.mxu0 0.0
    %155 = vmatprep.subr.mxu0 0.0
    %156 = vmatpush2.msra.mxu0 0.0
    %157 = vmatprep.subr.mxu0 0.0
    %158 = vmatpush2.msra.mxu0 0.0
    %159 = vmatprep.subr.mxu0 0.0
    %160 = vmatpush2.msra.mxu0 0.0
    %161 = vmatprep.subr.mxu0 0.0
    %162 = vmatpush2.msra.mxu0 0.0
    %163 = vmatprep.subr.mxu0 0.0
    %164 = vmatpush2.msra.mxu0 0.0
    %165 = vmatprep.subr.mxu0 0.0
    %166 = vmatpush2.msra.mxu0 0.0
    %167 = vmatprep.subr.mxu0 0.0
    %168 = vmatpush2.msra.mxu0 0.0
    %169 = vmatprep.subr.mxu0 0.0
    %170 = vmatpush2.msra.mxu0 0.0
    %171 = vmatprep.mubr.f32.mxu0 0.0
    %172 = vmatmul.mubr.f32.gmra.mxu0 %v98
    %v173 = vpop.f32.mrf.mxu0
    %v174 = vadd.f32 %v94, %v173
    %v175 = vpop.f32.mrf.mxu0
    %176 = vmatprep.mubr.f32.mxu0 0.0
    %177 = vmatmul.mubr.f32.gmra.mxu0 %v101
    %v178 = vpop.f32.mrf.mxu0
    %v179 = vadd.f32 %v94, %v178
    %v180 = vpop.f32.mrf.mxu0
    %181 = vdwg.mxu0
    %vm182 = vcmask 261120
    %v184 = vsel %vm182, 0.0, 0
    %186 = vmatprep.subr.mxu0 0.0
    %187 = vmatpush1.msra.mxu0 0.0
    %188 = vmatprep.subr.mxu0 0.0
    %189 = vmatpush1.msra.mxu0 0.0
    %190 = vmatprep.subr.mxu0 0.0
    %191 = vmatpush1.msra.mxu0 0.0
    %192 = vmatprep.subr.mxu0 0.0
    %193 = vmatpush1.msra.mxu0 0.0
    %194 = vmatprep.subr.mxu0 0.0
    %195 = vmatpush1.msra.mxu0 0.0
    %196 = vmatprep.subr.mxu0 0.0
    %197 = vmatpush1.msra.mxu0 0.0
    %198 = vmatprep.subr.mxu0 0.0
    %199 = vmatpush1.msra.mxu0 0.0
    %200 = vmatprep.subr.mxu0 0.0
    %201 = vmatpush1.msra.mxu0 0.0
    %202 = vmatprep.subr.mxu0 0.0
    %203 = vmatpush1.msra.mxu0 0.0
    %204 = vmatprep.subr.mxu0 0.0
    %205 = vmatpush1.msra.mxu0 0.0
    %206 = vmatprep.subr.mxu0 0.0
    %207 = vmatpush1.msra.mxu0 0.0
    %208 = vmatprep.subr.mxu0 0.0
    %209 = vmatpush1.msra.mxu0 0.0
    %210 = vmatprep.subr.mxu0 0.0
    %211 = vmatpush1.msra.mxu0 %v88
    %212 = vmatprep.subr.mxu0 0.0
    %213 = vmatpush1.msra.mxu0 %v87
    %214 = vmatprep.subr.mxu0 0.0
    %215 = vmatpush1.msra.mxu0 %v86
    %216 = vmatprep.subr.mxu0 0.0
    %217 = vmatpush1.msra.mxu0 %v85
    %218 = vmatprep.subr.mxu0 0.0
    %219 = vmatpush2.msra.mxu0 0.0
    %220 = vmatprep.subr.mxu0 0.0
    %221 = vmatpush2.msra.mxu0 0.0
    %222 = vmatprep.subr.mxu0 0.0
    %223 = vmatpush2.msra.mxu0 0.0
    %224 = vmatprep.subr.mxu0 0.0
    %225 = vmatpush2.msra.mxu0 0.0
    %226 = vmatprep.subr.mxu0 0.0
    %227 = vmatpush2.msra.mxu0 0.0
    %228 = vmatprep.subr.mxu0 0.0
    %229 = vmatpush2.msra.mxu0 0.0
    %230 = vmatprep.subr.mxu0 0.0
    %231 = vmatpush2.msra.mxu0 0.0
    %232 = vmatprep.subr.mxu0 0.0
    %233 = vmatpush2.msra.mxu0 0.0
    %234 = vmatprep.subr.mxu0 0.0
    %235 = vmatpush2.msra.mxu0 0.0
    %236 = vmatprep.subr.mxu0 0.0
    %237 = vmatpush2.msra.mxu0 0.0
    %238 = vmatprep.subr.mxu0 0.0
    %239 = vmatpush2.msra.mxu0 0.0
    %240 = vmatprep.subr.mxu0 0.0
    %241 = vmatpush2.msra.mxu0 0.0
    %242 = vmatprep.subr.mxu0 0.0
    %243 = vmatpush2.msra.mxu0 0.0
    %244 = vmatprep.subr.mxu0 0.0
    %245 = vmatpush2.msra.mxu0 0.0
    %246 = vmatprep.subr.mxu0 0.0
    %247 = vmatpush2.msra.mxu0 0.0
    %248 = vmatprep.subr.mxu0 0.0
    %249 = vmatpush2.msra.mxu0 0.0
    %250 = vmatprep.mubr.f32.mxu0 0.0
    %251 = vmatmul.mubr.f32.gmra.mxu0 %v184
    %v252 = vpop.f32.mrf.mxu0
    %v253 = vadd.f32 0.0, %v252
    %v254 = vpop.f32.mrf.mxu0
    %255 = vdwg.mxu0
    %v256 = vadd.f32 %v174, %v253
    %v257 = vxor.u32 %v256, 2147483648
    %v258 = vmul.f32 %v257, 1.442695
    %v259 = vpow.pop %v258
    %v260 = vadd.f32 %v259, 1.0
    %v261 = vrcp.pop %v260
    %v262 = vmul.f32 1.0, %v261
    %v263 = vtanh.pop %v256
    %v264 = vmul.f32 %v262, 0.0
    %266 = vrot.lane.b32.xlu0 %v263, 64
    %v267 = vpop.permute.xlu0 %266
    %v269 = vmul.f32 %v262, %v267
    %271 = vrot.lane.b32.xlu0 %v269, 32
    %v272 = vpop.permute.xlu0 %271
    %v274 = vadd.f32 %v264, %v272
    %v275 = vtanh.pop %v274
    %277 = vrot.lane.b32.xlu0 %v275, 64
    %v278 = vpop.permute.xlu0 %277
    %v280 = vmul.f32 %v262, %v278
    %282 = vrot.lane.b32.xlu0 %v280, 32
    %v283 = vpop.permute.xlu0 %282
    %vm285 = vcmask 254976
    %286 = vst.msk [vmem:[#allocation2] sm:$0x3] %vm285, %v283
    %v287 = vsel %vm182, %v283, 0
    %289 = vmatprep.subr.mxu0 0.0
    %290 = vmatpush1.msra.mxu0 0.0
    %291 = vmatprep.subr.mxu0 0.0
    %292 = vmatpush1.msra.mxu0 0.0
    %293 = vmatprep.subr.mxu0 0.0
    %294 = vmatpush1.msra.mxu0 0.0
    %295 = vmatprep.subr.mxu0 0.0
    %296 = vmatpush1.msra.mxu0 0.0
    %297 = vmatprep.subr.mxu0 0.0
    %298 = vmatpush1.msra.mxu0 0.0
    %299 = vmatprep.subr.mxu0 0.0
    %300 = vmatpush1.msra.mxu0 0.0
    %301 = vmatprep.subr.mxu0 0.0
    %302 = vmatpush1.msra.mxu0 0.0
    %303 = vmatprep.subr.mxu0 0.0
    %304 = vmatpush1.msra.mxu0 0.0
    %305 = vmatprep.subr.mxu0 0.0
    %306 = vmatpush1.msra.mxu0 0.0
    %307 = vmatprep.subr.mxu0 0.0
    %308 = vmatpush1.msra.mxu0 0.0
    %309 = vmatprep.subr.mxu0 0.0
    %310 = vmatpush1.msra.mxu0 0.0
    %311 = vmatprep.subr.mxu0 0.0
    %312 = vmatpush1.msra.mxu0 0.0
    %313 = vmatprep.subr.mxu0 0.0
    %314 = vmatpush1.msra.mxu0 %v88
    %315 = vmatprep.subr.mxu0 0.0
    %316 = vmatpush1.msra.mxu0 %v87
    %317 = vmatprep.subr.mxu0 0.0
    %318 = vmatpush1.msra.mxu0 %v86
    %319 = vmatprep.subr.mxu0 0.0
    %320 = vmatpush1.msra.mxu0 %v85
    %321 = vmatprep.subr.mxu0 0.0
    %322 = vmatpush2.msra.mxu0 0.0
    %323 = vmatprep.subr.mxu0 0.0
    %324 = vmatpush2.msra.mxu0 0.0
    %325 = vmatprep.subr.mxu0 0.0
    %326 = vmatpush2.msra.mxu0 0.0
    %327 = vmatprep.subr.mxu0 0.0
    %328 = vmatpush2.msra.mxu0 0.0
    %329 = vmatprep.subr.mxu0 0.0
    %330 = vmatpush2.msra.mxu0 0.0
    %331 = vmatprep.subr.mxu0 0.0
    %332 = vmatpush2.msra.mxu0 0.0
    %333 = vmatprep.subr.mxu0 0.0
    %334 = vmatpush2.msra.mxu0 0.0
    %335 = vmatprep.subr.mxu0 0.0
    %336 = vmatpush2.msra.mxu0 0.0
    %337 = vmatprep.subr.mxu0 0.0
    %338 = vmatpush2.msra.mxu0 0.0
    %339 = vmatprep.subr.mxu0 0.0
    %340 = vmatpush2.msra.mxu0 0.0
    %341 = vmatprep.subr.mxu0 0.0
    %342 = vmatpush2.msra.mxu0 0.0
    %343 = vmatprep.subr.mxu0 0.0
    %344 = vmatpush2.msra.mxu0 0.0
    %345 = vmatprep.subr.mxu0 0.0
    %346 = vmatpush2.msra.mxu0 0.0
    %347 = vmatprep.subr.mxu0 0.0
    %348 = vmatpush2.msra.mxu0 0.0
    %349 = vmatprep.subr.mxu0 0.0
    %350 = vmatpush2.msra.mxu0 0.0
    %351 = vmatprep.subr.mxu0 0.0
    %352 = vmatpush2.msra.mxu0 0.0
    %353 = vmatprep.mubr.f32.mxu0 0.0
    %354 = vmatmul.mubr.f32.gmra.mxu0 %v287
    %v355 = vpop.f32.mrf.mxu0
    %v356 = vadd.f32 0.0, %v355
    %v357 = vpop.f32.mrf.mxu0
    %358 = vdwg.mxu0
    %v360 = vrot.slane %v356, 6
    %v362 = vadd.f32 %v174, %v360
    %v363 = vxor.u32 %v362, 2147483648
    %v364 = vmul.f32 %v363, 1.442695
    %v365 = vpow.pop %v364
    %v366 = vadd.f32 %v365, 1.0
    %v367 = vrcp.pop %v366
    %v368 = vmul.f32 1.0, %v367
    %v369 = vtanh.pop %v362
    %v371 = vrot.slane %v274, 6
    %v373 = vmul.f32 %v368, %v371
    %375 = vrot.lane.b32.xlu0 %v369, 64
    %v376 = vpop.permute.xlu0 %375
    %v378 = vmul.f32 %v368, %v376
    %380 = vrot.lane.b32.xlu0 %v378, 32
    %v381 = vpop.permute.xlu0 %380
    %v383 = vadd.f32 %v373, %v381
    %v384 = vtanh.pop %v383
    %386 = vrot.lane.b32.xlu0 %v384, 64
    %v387 = vpop.permute.xlu0 %386
    %v389 = vmul.f32 %v368, %v387
    %391 = vrot.lane.b32.xlu0 %v389, 32
    %v392 = vpop.permute.xlu0 %391
    %vm394 = vcmask 257026
    %395 = vst.msk [vmem:[#allocation2] sm:$0xc] %vm394, %v392
    %v396 = vrot.slane %v389, 2
    %397 = vrot.lane.b32.xlu0 %v396, 32
    %v398 = vpop.permute.xlu0 %397
    %v399 = vsel %vm182, %v398, 0
    %401 = vmatprep.subr.mxu0 0.0
    %402 = vmatpush1.msra.mxu0 0.0
    %403 = vmatprep.subr.mxu0 0.0
    %404 = vmatpush1.msra.mxu0 0.0
    %405 = vmatprep.subr.mxu0 0.0
    %406 = vmatpush1.msra.mxu0 0.0
    %407 = vmatprep.subr.mxu0 0.0
    %408 = vmatpush1.msra.mxu0 0.0
    %409 = vmatprep.subr.mxu0 0.0
    %410 = vmatpush1.msra.mxu0 0.0
    %411 = vmatprep.subr.mxu0 0.0
    %412 = vmatpush1.msra.mxu0 0.0
    %413 = vmatprep.subr.mxu0 0.0
    %414 = vmatpush1.msra.mxu0 0.0
    %415 = vmatprep.subr.mxu0 0.0
    %416 = vmatpush1.msra.mxu0 0.0
    %417 = vmatprep.subr.mxu0 0.0
    %418 = vmatpush1.msra.mxu0 0.0
    %419 = vmatprep.subr.mxu0 0.0
    %420 = vmatpush1.msra.mxu0 0.0
    %421 = vmatprep.subr.mxu0 0.0
    %422 = vmatpush1.msra.mxu0 0.0
    %423 = vmatprep.subr.mxu0 0.0
    %424 = vmatpush1.msra.mxu0 0.0
    %425 = vmatprep.subr.mxu0 0.0
    %426 = vmatpush1.msra.mxu0 %v88
    %427 = vmatprep.subr.mxu0 0.0
    %428 = vmatpush1.msra.mxu0 %v87
    %429 = vmatprep.subr.mxu0 0.0
    %430 = vmatpush1.msra.mxu0 %v86
    %431 = vmatprep.subr.mxu0 0.0
    %432 = vmatpush1.msra.mxu0 %v85
    %433 = vmatprep.subr.mxu0 0.0
    %434 = vmatpush2.msra.mxu0 0.0
    %435 = vmatprep.subr.mxu0 0.0
    %436 = vmatpush2.msra.mxu0 0.0
    %437 = vmatprep.subr.mxu0 0.0
    %438 = vmatpush2.msra.mxu0 0.0
    %439 = vmatprep.subr.mxu0 0.0
    %440 = vmatpush2.msra.mxu0 0.0
    %441 = vmatprep.subr.mxu0 0.0
    %442 = vmatpush2.msra.mxu0 0.0
    %443 = vmatprep.subr.mxu0 0.0
    %444 = vmatpush2.msra.mxu0 0.0
    %445 = vmatprep.subr.mxu0 0.0
    %446 = vmatpush2.msra.mxu0 0.0
    %447 = vmatprep.subr.mxu0 0.0
    %448 = vmatpush2.msra.mxu0 0.0
    %449 = vmatprep.subr.mxu0 0.0
    %450 = vmatpush2.msra.mxu0 0.0
    %451 = vmatprep.subr.mxu0 0.0
    %452 = vmatpush2.msra.mxu0 0.0
    %453 = vmatprep.subr.mxu0 0.0
    %454 = vmatpush2.msra.mxu0 0.0
    %455 = vmatprep.subr.mxu0 0.0
    %456 = vmatpush2.msra.mxu0 0.0
    %457 = vmatprep.subr.mxu0 0.0
    %458 = vmatpush2.msra.mxu0 0.0
    %459 = vmatprep.subr.mxu0 0.0
    %460 = vmatpush2.msra.mxu0 0.0
    %461 = vmatprep.subr.mxu0 0.0
    %462 = vmatpush2.msra.mxu0 0.0
    %463 = vmatprep.subr.mxu0 0.0
    %464 = vmatpush2.msra.mxu0 0.0
    %465 = vmatprep.mubr.f32.mxu0 0.0
    %466 = vmatmul.mubr.f32.gmra.mxu0 %v399
    %v467 = vpop.f32.mrf.mxu0
    %v468 = vadd.f32 0.0, %v467
    %v469 = vpop.f32.mrf.mxu0
    %470 = vdwg.mxu0
    %v472 = vrot.slane %v468, 4
    %v474 = vadd.f32 %v174, %v472
    %v475 = vxor.u32 %v474, 2147483648
    %v476 = vmul.f32 %v475, 1.442695
    %v477 = vpow.pop %v476
    %v478 = vadd.f32 %v477, 1.0
    %v479 = vrcp.pop %v478
    %v480 = vmul.f32 1.0, %v479
    %v481 = vtanh.pop %v474
    %v483 = vrot.slane %v383, 6
    %v485 = vmul.f32 %v480, %v483
    %487 = vrot.lane.b32.xlu0 %v481, 64
    %v488 = vpop.permute.xlu0 %487
    %v490 = vmul.f32 %v480, %v488
    %492 = vrot.lane.b32.xlu0 %v490, 32
    %v493 = vpop.permute.xlu0 %492
    %v495 = vadd.f32 %v485, %v493
    %v496 = vtanh.pop %v495
    %498 = vrot.lane.b32.xlu0 %v496, 64
    %v499 = vpop.permute.xlu0 %498
    %v501 = vmul.f32 %v480, %v499
    %503 = vrot.lane.b32.xlu0 %v501, 32
    %v504 = vpop.permute.xlu0 %503
    %vm506 = vcmask 259076
    %507 = vst.msk [vmem:[#allocation2] sm:$0x30] %vm506, %v504
    %v508 = vrot.slane %v501, 4
    %509 = vrot.lane.b32.xlu0 %v508, 32
    %v510 = vpop.permute.xlu0 %509
    %v511 = vsel %vm182, %v510, 0
    %513 = vmatprep.subr.mxu0 0.0
    %514 = vmatpush1.msra.mxu0 0.0
    %515 = vmatprep.subr.mxu0 0.0
    %516 = vmatpush1.msra.mxu0 0.0
    %517 = vmatprep.subr.mxu0 0.0
    %518 = vmatpush1.msra.mxu0 0.0
    %519 = vmatprep.subr.mxu0 0.0
    %520 = vmatpush1.msra.mxu0 0.0
    %521 = vmatprep.subr.mxu0 0.0
    %522 = vmatpush1.msra.mxu0 0.0
    %523 = vmatprep.subr.mxu0 0.0
    %524 = vmatpush1.msra.mxu0 0.0
    %525 = vmatprep.subr.mxu0 0.0
    %526 = vmatpush1.msra.mxu0 0.0
    %527 = vmatprep.subr.mxu0 0.0
    %528 = vmatpush1.msra.mxu0 0.0
    %529 = vmatprep.subr.mxu0 0.0
    %530 = vmatpush1.msra.mxu0 0.0
    %531 = vmatprep.subr.mxu0 0.0
    %532 = vmatpush1.msra.mxu0 0.0
    %533 = vmatprep.subr.mxu0 0.0
    %534 = vmatpush1.msra.mxu0 0.0
    %535 = vmatprep.subr.mxu0 0.0
    %536 = vmatpush1.msra.mxu0 0.0
    %537 = vmatprep.subr.mxu0 0.0
    %538 = vmatpush1.msra.mxu0 %v88
    %539 = vmatprep.subr.mxu0 0.0
    %540 = vmatpush1.msra.mxu0 %v87
    %541 = vmatprep.subr.mxu0 0.0
    %542 = vmatpush1.msra.mxu0 %v86
    %543 = vmatprep.subr.mxu0 0.0
    %544 = vmatpush1.msra.mxu0 %v85
    %545 = vmatprep.subr.mxu0 0.0
    %546 = vmatpush2.msra.mxu0 0.0
    %547 = vmatprep.subr.mxu0 0.0
    %548 = vmatpush2.msra.mxu0 0.0
    %549 = vmatprep.subr.mxu0 0.0
    %550 = vmatpush2.msra.mxu0 0.0
    %551 = vmatprep.subr.mxu0 0.0
    %552 = vmatpush2.msra.mxu0 0.0
    %553 = vmatprep.subr.mxu0 0.0
    %554 = vmatpush2.msra.mxu0 0.0
    %555 = vmatprep.subr.mxu0 0.0
    %556 = vmatpush2.msra.mxu0 0.0
    %557 = vmatprep.subr.mxu0 0.0
    %558 = vmatpush2.msra.mxu0 0.0
    %559 = vmatprep.subr.mxu0 0.0
    %560 = vmatpush2.msra.mxu0 0.0
    %561 = vmatprep.subr.mxu0 0.0
    %562 = vmatpush2.msra.mxu0 0.0
    %563 = vmatprep.subr.mxu0 0.0
    %564 = vmatpush2.msra.mxu0 0.0
    %565 = vmatprep.subr.mxu0 0.0
    %566 = vmatpush2.msra.mxu0 0.0
    %567 = vmatprep.subr.mxu0 0.0
    %568 = vmatpush2.msra.mxu0 0.0
    %569 = vmatprep.subr.mxu0 0.0
    %570 = vmatpush2.msra.mxu0 0.0
    %571 = vmatprep.subr.mxu0 0.0
    %572 = vmatpush2.msra.mxu0 0.0
    %573 = vmatprep.subr.mxu0 0.0
    %574 = vmatpush2.msra.mxu0 0.0
    %575 = vmatprep.subr.mxu0 0.0
    %576 = vmatpush2.msra.mxu0 0.0
    %577 = vmatprep.mubr.f32.mxu0 0.0
    %578 = vmatmul.mubr.f32.gmra.mxu0 %v511
    %v579 = vpop.f32.mrf.mxu0
    %v580 = vadd.f32 0.0, %v579
    %v581 = vpop.f32.mrf.mxu0
    %582 = vdwg.mxu0
    %v584 = vrot.slane %v580, 2
    %v586 = vadd.f32 %v174, %v584
    %v587 = vxor.u32 %v586, 2147483648
    %v588 = vmul.f32 %v587, 1.442695
    %v589 = vpow.pop %v588
    %v590 = vadd.f32 %v589, 1.0
    %v591 = vrcp.pop %v590
    %v592 = vmul.f32 1.0, %v591
    %v593 = vtanh.pop %v586
    %v595 = vrot.slane %v495, 6
    %v597 = vmul.f32 %v592, %v595
    %599 = vrot.lane.b32.xlu0 %v593, 64
    %v600 = vpop.permute.xlu0 %599
    %v602 = vmul.f32 %v592, %v600
    %604 = vrot.lane.b32.xlu0 %v602, 32
    %v605 = vpop.permute.xlu0 %604
    %v607 = vadd.f32 %v597, %v605
    %v608 = vtanh.pop %v607
    %610 = vrot.lane.b32.xlu0 %v608, 64
    %v611 = vpop.permute.xlu0 %610
    %v613 = vmul.f32 %v592, %v611
    %615 = vrot.lane.b32.xlu0 %v613, 32
    %v616 = vpop.permute.xlu0 %615
    %vm618 = vcmask 261126
    %619 = vst.msk [vmem:[#allocation2] sm:$0xc0] %vm618, %v616
    %v620 = vrot.slane %v613, 6
    %621 = vrot.lane.b32.xlu0 %v620, 32
    %v622 = vpop.permute.xlu0 %621
    %v623 = vsel %vm182, %v622, 0
    %625 = vmatprep.subr.mxu0 0.0
    %626 = vmatpush1.msra.mxu0 0.0
    %627 = vmatprep.subr.mxu0 0.0
    %628 = vmatpush1.msra.mxu0 0.0
    %629 = vmatprep.subr.mxu0 0.0
    %630 = vmatpush1.msra.mxu0 0.0
    %631 = vmatprep.subr.mxu0 0.0
    %632 = vmatpush1.msra.mxu0 0.0
    %633 = vmatprep.subr.mxu0 0.0
    %634 = vmatpush1.msra.mxu0 0.0
    %635 = vmatprep.subr.mxu0 0.0
    %636 = vmatpush1.msra.mxu0 0.0
    %637 = vmatprep.subr.mxu0 0.0
    %638 = vmatpush1.msra.mxu0 0.0
    %639 = vmatprep.subr.mxu0 0.0
    %640 = vmatpush1.msra.mxu0 0.0
    %641 = vmatprep.subr.mxu0 0.0
    %642 = vmatpush1.msra.mxu0 0.0
    %643 = vmatprep.subr.mxu0 0.0
    %644 = vmatpush1.msra.mxu0 0.0
    %645 = vmatprep.subr.mxu0 0.0
    %646 = vmatpush1.msra.mxu0 0.0
    %647 = vmatprep.subr.mxu0 0.0
    %648 = vmatpush1.msra.mxu0 0.0
    %649 = vmatprep.subr.mxu0 0.0
    %650 = vmatpush1.msra.mxu0 %v88
    %651 = vmatprep.subr.mxu0 0.0
    %652 = vmatpush1.msra.mxu0 %v87
    %653 = vmatprep.subr.mxu0 0.0
    %654 = vmatpush1.msra.mxu0 %v86
    %655 = vmatprep.subr.mxu0 0.0
    %656 = vmatpush1.msra.mxu0 %v85
    %657 = vmatprep.subr.mxu0 0.0
    %658 = vmatpush2.msra.mxu0 0.0
    %659 = vmatprep.subr.mxu0 0.0
    %660 = vmatpush2.msra.mxu0 0.0
    %661 = vmatprep.subr.mxu0 0.0
    %662 = vmatpush2.msra.mxu0 0.0
    %663 = vmatprep.subr.mxu0 0.0
    %664 = vmatpush2.msra.mxu0 0.0
    %665 = vmatprep.subr.mxu0 0.0
    %666 = vmatpush2.msra.mxu0 0.0
    %667 = vmatprep.subr.mxu0 0.0
    %668 = vmatpush2.msra.mxu0 0.0
    %669 = vmatprep.subr.mxu0 0.0
    %670 = vmatpush2.msra.mxu0 0.0
    %671 = vmatprep.subr.mxu0 0.0
    %672 = vmatpush2.msra.mxu0 0.0
    %673 = vmatprep.subr.mxu0 0.0
    %674 = vmatpush2.msra.mxu0 0.0
    %675 = vmatprep.subr.mxu0 0.0
    %676 = vmatpush2.msra.mxu0 0.0
    %677 = vmatprep.subr.mxu0 0.0
    %678 = vmatpush2.msra.mxu0 0.0
    %679 = vmatprep.subr.mxu0 0.0
    %680 = vmatpush2.msra.mxu0 0.0
    %681 = vmatprep.subr.mxu0 0.0
    %682 = vmatpush2.msra.mxu0 0.0
    %683 = vmatprep.subr.mxu0 0.0
    %684 = vmatpush2.msra.mxu0 0.0
    %685 = vmatprep.subr.mxu0 0.0
    %686 = vmatpush2.msra.mxu0 0.0
    %687 = vmatprep.subr.mxu0 0.0
    %688 = vmatpush2.msra.mxu0 0.0
    %689 = vmatprep.mubr.f32.mxu0 0.0
    %690 = vmatmul.mubr.f32.gmra.mxu0 %v623
    %v691 = vpop.f32.mrf.mxu0
    %v692 = vadd.f32 0.0, %v691
    %v693 = vpop.f32.mrf.mxu0
    %694 = vdwg.mxu0
    %v695 = vadd.f32 %v179, %v692
    %v696 = vxor.u32 %v695, 2147483648
    %v697 = vmul.f32 %v696, 1.442695
    %v698 = vpow.pop %v697
    %v699 = vadd.f32 %v698, 1.0
    %v700 = vrcp.pop %v699
    %v701 = vmul.f32 1.0, %v700
    %v702 = vtanh.pop %v695
    %v704 = vrot.slane %v607, 6
    %v706 = vmul.f32 %v701, %v704
    %708 = vrot.lane.b32.xlu0 %v702, 64
    %v709 = vpop.permute.xlu0 %708
    %v711 = vmul.f32 %v701, %v709
    %713 = vrot.lane.b32.xlu0 %v711, 32
    %v714 = vpop.permute.xlu0 %713
    %v716 = vadd.f32 %v706, %v714
    %v717 = vtanh.pop %v716
    %719 = vrot.lane.b32.xlu0 %v717, 64
    %v720 = vpop.permute.xlu0 %719
    %v722 = vmul.f32 %v701, %v720
    %724 = vrot.lane.b32.xlu0 %v722, 32
    %v725 = vpop.permute.xlu0 %724
    %727 = vst.msk [vmem:[#allocation2 + $0x8] sm:$0x3] %vm285, %v725
    %v728 = vsel %vm182, %v725, 0
    %730 = vmatprep.subr.mxu0 0.0
    %731 = vmatpush1.msra.mxu0 0.0
    %732 = vmatprep.subr.mxu0 0.0
    %733 = vmatpush1.msra.mxu0 0.0
    %734 = vmatprep.subr.mxu0 0.0
    %735 = vmatpush1.msra.mxu0 0.0
    %736 = vmatprep.subr.mxu0 0.0
    %737 = vmatpush1.msra.mxu0 0.0
    %738 = vmatprep.subr.mxu0 0.0
    %739 = vmatpush1.msra.mxu0 0.0
    %740 = vmatprep.subr.mxu0 0.0
    %741 = vmatpush1.msra.mxu0 0.0
    %742 = vmatprep.subr.mxu0 0.0
    %743 = vmatpush1.msra.mxu0 0.0
    %744 = vmatprep.subr.mxu0 0.0
    %745 = vmatpush1.msra.mxu0 0.0
    %746 = vmatprep.subr.mxu0 0.0
    %747 = vmatpush1.msra.mxu0 0.0
    %748 = vmatprep.subr.mxu0 0.0
    %749 = vmatpush1.msra.mxu0 0.0
    %750 = vmatprep.subr.mxu0 0.0
    %751 = vmatpush1.msra.mxu0 0.0
    %752 = vmatprep.subr.mxu0 0.0
    %753 = vmatpush1.msra.mxu0 0.0
    %754 = vmatprep.subr.mxu0 0.0
    %755 = vmatpush1.msra.mxu0 %v88
    %756 = vmatprep.subr.mxu0 0.0
    %757 = vmatpush1.msra.mxu0 %v87
    %758 = vmatprep.subr.mxu0 0.0
    %759 = vmatpush1.msra.mxu0 %v86
    %760 = vmatprep.subr.mxu0 0.0
    %761 = vmatpush1.msra.mxu0 %v85
    %762 = vmatprep.subr.mxu0 0.0
    %763 = vmatpush2.msra.mxu0 0.0
    %764 = vmatprep.subr.mxu0 0.0
    %765 = vmatpush2.msra.mxu0 0.0
    %766 = vmatprep.subr.mxu0 0.0
    %767 = vmatpush2.msra.mxu0 0.0
    %768 = vmatprep.subr.mxu0 0.0
    %769 = vmatpush2.msra.mxu0 0.0
    %770 = vmatprep.subr.mxu0 0.0
    %771 = vmatpush2.msra.mxu0 0.0
    %772 = vmatprep.subr.mxu0 0.0
    %773 = vmatpush2.msra.mxu0 0.0
    %774 = vmatprep.subr.mxu0 0.0
    %775 = vmatpush2.msra.mxu0 0.0
    %776 = vmatprep.subr.mxu0 0.0
    %777 = vmatpush2.msra.mxu0 0.0
    %778 = vmatprep.subr.mxu0 0.0
    %779 = vmatpush2.msra.mxu0 0.0
    %780 = vmatprep.subr.mxu0 0.0
    %781 = vmatpush2.msra.mxu0 0.0
    %782 = vmatprep.subr.mxu0 0.0
    %783 = vmatpush2.msra.mxu0 0.0
    %784 = vmatprep.subr.mxu0 0.0
    %785 = vmatpush2.msra.mxu0 0.0
    %786 = vmatprep.subr.mxu0 0.0
    %787 = vmatpush2.msra.mxu0 0.0
    %788 = vmatprep.subr.mxu0 0.0
    %789 = vmatpush2.msra.mxu0 0.0
    %790 = vmatprep.subr.mxu0 0.0
    %791 = vmatpush2.msra.mxu0 0.0
    %792 = vmatprep.subr.mxu0 0.0
    %793 = vmatpush2.msra.mxu0 0.0
    %794 = vmatprep.mubr.f32.mxu0 0.0
    %795 = vmatmul.mubr.f32.gmra.mxu0 %v728
    %v796 = vpop.f32.mrf.mxu0
    %v797 = vadd.f32 0.0, %v796
    %v798 = vpop.f32.mrf.mxu0
    %799 = vdwg.mxu0
    %v801 = vrot.slane %v797, 6
    %v803 = vadd.f32 %v179, %v801
    %v804 = vxor.u32 %v803, 2147483648
    %v805 = vmul.f32 %v804, 1.442695
    %v806 = vpow.pop %v805
    %v807 = vadd.f32 %v806, 1.0
    %v808 = vrcp.pop %v807
    %v809 = vmul.f32 1.0, %v808
    %v810 = vtanh.pop %v803
    %v812 = vrot.slane %v716, 6
    %v814 = vmul.f32 %v809, %v812
    %816 = vrot.lane.b32.xlu0 %v810, 64
    %v817 = vpop.permute.xlu0 %816
    %v819 = vmul.f32 %v809, %v817
    %821 = vrot.lane.b32.xlu0 %v819, 32
    %v822 = vpop.permute.xlu0 %821
    %v824 = vadd.f32 %v814, %v822
    %v825 = vtanh.pop %v824
    %827 = vrot.lane.b32.xlu0 %v825, 64
    %v828 = vpop.permute.xlu0 %827
    %v830 = vmul.f32 %v809, %v828
    %832 = vrot.lane.b32.xlu0 %v830, 32
    %v833 = vpop.permute.xlu0 %832
    %835 = vst.msk [vmem:[#allocation2 + $0x8] sm:$0xc] %vm394, %v833
    %v836 = vrot.slane %v830, 2
    %837 = vrot.lane.b32.xlu0 %v836, 32
    %v838 = vpop.permute.xlu0 %837
    %v839 = vsel %vm182, %v838, 0
    %841 = vmatprep.subr.mxu0 0.0
    %842 = vmatpush1.msra.mxu0 0.0
    %843 = vmatprep.subr.mxu0 0.0
    %844 = vmatpush1.msra.mxu0 0.0
    %845 = vmatprep.subr.mxu0 0.0
    %846 = vmatpush1.msra.mxu0 0.0
    %847 = vmatprep.subr.mxu0 0.0
    %848 = vmatpush1.msra.mxu0 0.0
    %849 = vmatprep.subr.mxu0 0.0
    %850 = vmatpush1.msra.mxu0 0.0
    %851 = vmatprep.subr.mxu0 0.0
    %852 = vmatpush1.msra.mxu0 0.0
    %853 = vmatprep.subr.mxu0 0.0
    %854 = vmatpush1.msra.mxu0 0.0
    %855 = vmatprep.subr.mxu0 0.0
    %856 = vmatpush1.msra.mxu0 0.0
    %857 = vmatprep.subr.mxu0 0.0
    %858 = vmatpush1.msra.mxu0 0.0
    %859 = vmatprep.subr.mxu0 0.0
    %860 = vmatpush1.msra.mxu0 0.0
    %861 = vmatprep.subr.mxu0 0.0
    %862 = vmatpush1.msra.mxu0 0.0
    %863 = vmatprep.subr.mxu0 0.0
    %864 = vmatpush1.msra.mxu0 0.0
    %865 = vmatprep.subr.mxu0 0.0
    %866 = vmatpush1.msra.mxu0 %v88
    %867 = vmatprep.subr.mxu0 0.0
    %868 = vmatpush1.msra.mxu0 %v87
    %869 = vmatprep.subr.mxu0 0.0
    %870 = vmatpush1.msra.mxu0 %v86
    %871 = vmatprep.subr.mxu0 0.0
    %872 = vmatpush1.msra.mxu0 %v85
    %873 = vmatprep.subr.mxu0 0.0
    %874 = vmatpush2.msra.mxu0 0.0
    %875 = vmatprep.subr.mxu0 0.0
    %876 = vmatpush2.msra.mxu0 0.0
    %877 = vmatprep.subr.mxu0 0.0
    %878 = vmatpush2.msra.mxu0 0.0
    %879 = vmatprep.subr.mxu0 0.0
    %880 = vmatpush2.msra.mxu0 0.0
    %881 = vmatprep.subr.mxu0 0.0
    %882 = vmatpush2.msra.mxu0 0.0
    %883 = vmatprep.subr.mxu0 0.0
    %884 = vmatpush2.msra.mxu0 0.0
    %885 = vmatprep.subr.mxu0 0.0
    %886 = vmatpush2.msra.mxu0 0.0
    %887 = vmatprep.subr.mxu0 0.0
    %888 = vmatpush2.msra.mxu0 0.0
    %889 = vmatprep.subr.mxu0 0.0
    %890 = vmatpush2.msra.mxu0 0.0
    %891 = vmatprep.subr.mxu0 0.0
    %892 = vmatpush2.msra.mxu0 0.0
    %893 = vmatprep.subr.mxu0 0.0
    %894 = vmatpush2.msra.mxu0 0.0
    %895 = vmatprep.subr.mxu0 0.0
    %896 = vmatpush2.msra.mxu0 0.0
    %897 = vmatprep.subr.mxu0 0.0
    %898 = vmatpush2.msra.mxu0 0.0
    %899 = vmatprep.subr.mxu0 0.0
    %900 = vmatpush2.msra.mxu0 0.0
    %901 = vmatprep.subr.mxu0 0.0
    %902 = vmatpush2.msra.mxu0 0.0
    %903 = vmatprep.subr.mxu0 0.0
    %904 = vmatpush2.msra.mxu0 0.0
    %905 = vmatprep.mubr.f32.mxu0 0.0
    %906 = vmatmul.mubr.f32.gmra.mxu0 %v839
    %v907 = vpop.f32.mrf.mxu0
    %v908 = vadd.f32 0.0, %v907
    %v909 = vpop.f32.mrf.mxu0
    %910 = vdwg.mxu0
    %v912 = vrot.slane %v908, 4
    %v914 = vadd.f32 %v179, %v912
    %v915 = vxor.u32 %v914, 2147483648
    %v916 = vmul.f32 %v915, 1.442695
    %v917 = vpow.pop %v916
    %v918 = vadd.f32 %v917, 1.0
    %v919 = vrcp.pop %v918
    %v920 = vmul.f32 1.0, %v919
    %v921 = vtanh.pop %v914
    %v923 = vrot.slane %v824, 6
    %v925 = vmul.f32 %v920, %v923
    %927 = vrot.lane.b32.xlu0 %v921, 64
    %v928 = vpop.permute.xlu0 %927
    %v930 = vmul.f32 %v920, %v928
    %932 = vrot.lane.b32.xlu0 %v930, 32
    %v933 = vpop.permute.xlu0 %932
    %v935 = vadd.f32 %v925, %v933
    %v936 = vtanh.pop %v935
    %938 = vrot.lane.b32.xlu0 %v936, 64
    %v939 = vpop.permute.xlu0 %938
    %v941 = vmul.f32 %v920, %v939
    %943 = vrot.lane.b32.xlu0 %v941, 32
    %v944 = vpop.permute.xlu0 %943
    %946 = vst.msk [vmem:[#allocation2 + $0x8] sm:$0x30] %vm506, %v944
    %v947 = vrot.slane %v941, 4
    %948 = vrot.lane.b32.xlu0 %v947, 32
    %v949 = vpop.permute.xlu0 %948
    %v950 = vsel %vm182, %v949, 0
    %952 = vmatprep.subr.mxu0 0.0
    %953 = vmatpush1.msra.mxu0 0.0
    %954 = vmatprep.subr.mxu0 0.0
    %955 = vmatpush1.msra.mxu0 0.0
    %956 = vmatprep.subr.mxu0 0.0
    %957 = vmatpush1.msra.mxu0 0.0
    %958 = vmatprep.subr.mxu0 0.0
    %959 = vmatpush1.msra.mxu0 0.0
    %960 = vmatprep.subr.mxu0 0.0
    %961 = vmatpush1.msra.mxu0 0.0
    %962 = vmatprep.subr.mxu0 0.0
    %963 = vmatpush1.msra.mxu0 0.0
    %964 = vmatprep.subr.mxu0 0.0
    %965 = vmatpush1.msra.mxu0 0.0
    %966 = vmatprep.subr.mxu0 0.0
    %967 = vmatpush1.msra.mxu0 0.0
    %968 = vmatprep.subr.mxu0 0.0
    %969 = vmatpush1.msra.mxu0 0.0
    %970 = vmatprep.subr.mxu0 0.0
    %971 = vmatpush1.msra.mxu0 0.0
    %972 = vmatprep.subr.mxu0 0.0
    %973 = vmatpush1.msra.mxu0 0.0
    %974 = vmatprep.subr.mxu0 0.0
    %975 = vmatpush1.msra.mxu0 0.0
    %976 = vmatprep.subr.mxu0 0.0
    %977 = vmatpush1.msra.mxu0 %v88
    %978 = vmatprep.subr.mxu0 0.0
    %979 = vmatpush1.msra.mxu0 %v87
    %980 = vmatprep.subr.mxu0 0.0
    %981 = vmatpush1.msra.mxu0 %v86
    %982 = vmatprep.subr.mxu0 0.0
    %983 = vmatpush1.msra.mxu0 %v85
    %984 = vmatprep.subr.mxu0 0.0
    %985 = vmatpush2.msra.mxu0 0.0
    %986 = vmatprep.subr.mxu0 0.0
    %987 = vmatpush2.msra.mxu0 0.0
    %988 = vmatprep.subr.mxu0 0.0
    %989 = vmatpush2.msra.mxu0 0.0
    %990 = vmatprep.subr.mxu0 0.0
    %991 = vmatpush2.msra.mxu0 0.0
    %992 = vmatprep.subr.mxu0 0.0
    %993 = vmatpush2.msra.mxu0 0.0
    %994 = vmatprep.subr.mxu0 0.0
    %995 = vmatpush2.msra.mxu0 0.0
    %996 = vmatprep.subr.mxu0 0.0
    %997 = vmatpush2.msra.mxu0 0.0
    %998 = vmatprep.subr.mxu0 0.0
    %999 = vmatpush2.msra.mxu0 0.0
    %1000 = vmatprep.subr.mxu0 0.0
    %1001 = vmatpush2.msra.mxu0 0.0
    %1002 = vmatprep.subr.mxu0 0.0
    %1003 = vmatpush2.msra.mxu0 0.0
    %1004 = vmatprep.subr.mxu0 0.0
    %1005 = vmatpush2.msra.mxu0 0.0
    %1006 = vmatprep.subr.mxu0 0.0
    %1007 = vmatpush2.msra.mxu0 0.0
    %1008 = vmatprep.subr.mxu0 0.0
    %1009 = vmatpush2.msra.mxu0 0.0
    %1010 = vmatprep.subr.mxu0 0.0
    %1011 = vmatpush2.msra.mxu0 0.0
    %1012 = vmatprep.subr.mxu0 0.0
    %1013 = vmatpush2.msra.mxu0 0.0
    %1014 = vmatprep.subr.mxu0 0.0
    %1015 = vmatpush2.msra.mxu0 0.0
    %1016 = vmatprep.mubr.f32.mxu0 0.0
    %1017 = vmatmul.mubr.f32.gmra.mxu0 %v950
    %v1018 = vpop.f32.mrf.mxu0
    %v1019 = vadd.f32 0.0, %v1018
    %v1020 = vpop.f32.mrf.mxu0
    %1021 = vdwg.mxu0
    %v1023 = vrot.slane %v1019, 2
    %v1025 = vadd.f32 %v179, %v1023
    %v1026 = vxor.u32 %v1025, 2147483648
    %v1027 = vmul.f32 %v1026, 1.442695
    %v1028 = vpow.pop %v1027
    %v1029 = vadd.f32 %v1028, 1.0
    %v1030 = vrcp.pop %v1029
    %v1031 = vmul.f32 1.0, %v1030
    %v1032 = vtanh.pop %v1025
    %v1034 = vrot.slane %v935, 6
    %v1036 = vmul.f32 %v1031, %v1034
    %1038 = vrot.lane.b32.xlu0 %v1032, 64
    %v1039 = vpop.permute.xlu0 %1038
    %v1041 = vmul.f32 %v1031, %v1039
    %1043 = vrot.lane.b32.xlu0 %v1041, 32
    %v1044 = vpop.permute.xlu0 %1043
    %v1046 = vadd.f32 %v1036, %v1044
    %v1047 = vtanh.pop %v1046
    %1049 = vrot.lane.b32.xlu0 %v1047, 64
    %v1050 = vpop.permute.xlu0 %1049
    %v1052 = vmul.f32 %v1031, %v1050
    %1054 = vrot.lane.b32.xlu0 %v1052, 32
    %v1055 = vpop.permute.xlu0 %1054
    %1057 = vst.msk [vmem:[#allocation2 + $0x8] sm:$0xc0] %vm618, %v1055
    %v1058 = vld [vmem:[#allocation2] sm:$0xff]
    %v1059 = vld [vmem:[#allocation2 + $0x8] sm:$0xff]
    %v1060 = vld [vmem:[#allocation8] sm:$0xff]
    %v1061 = vld [vmem:[#allocation8 + $0x8] sm:$0xff]
    %v1062 = vld [vmem:[#allocation8 + $0x10] sm:$0xff]
    %v1063 = vld [vmem:[#allocation8 + $0x18] sm:$0xff]
    %v1064 = vld [vmem:[%s5] sm:$0xff]
    %v1065 = vld [vmem:[%s5 + $0x8] sm:$0xff]
    %v1066 = vld [vmem:[%s5 + $0x10] sm:$0xff]
    %v1067 = vld [vmem:[%s5 + $0x18] sm:$0xff]
    %v1068 = vld [vmem:[#allocation9] sm:$0x1]
    %v1070 = vlaneseq
    %v1071 = vshrl.u32 %v1070, 7
    %v1072 = vsub.s32 0, %v1071
    %v1073 = vrot.slane %v1068, %v1072
    %v1076 = vsel %vm182, %v1058, 0
    %v1079 = vsel %vm182, %v1059, 0
    %1081 = vmatprep.subr.mxu0 0.0
    %1082 = vmatpush1.msra.mxu0 0.0
    %1083 = vmatprep.subr.mxu0 0.0
    %1084 = vmatpush1.msra.mxu0 0.0
    %1085 = vmatprep.subr.mxu0 0.0
    %1086 = vmatpush1.msra.mxu0 0.0
    %1087 = vmatprep.subr.mxu0 0.0
    %1088 = vmatpush1.msra.mxu0 0.0
    %1089 = vmatprep.subr.mxu0 0.0
    %1090 = vmatpush1.msra.mxu0 0.0
    %1091 = vmatprep.subr.mxu0 0.0
    %1092 = vmatpush1.msra.mxu0 0.0
    %1093 = vmatprep.subr.mxu0 0.0
    %1094 = vmatpush1.msra.mxu0 0.0
    %1095 = vmatprep.subr.mxu0 0.0
    %1096 = vmatpush1.msra.mxu0 0.0
    %1097 = vmatprep.subr.mxu0 0.0
    %1098 = vmatpush1.msra.mxu0 0.0
    %1099 = vmatprep.subr.mxu0 0.0
    %1100 = vmatpush1.msra.mxu0 0.0
    %1101 = vmatprep.subr.mxu0 0.0
    %1102 = vmatpush1.msra.mxu0 0.0
    %1103 = vmatprep.subr.mxu0 0.0
    %1104 = vmatpush1.msra.mxu0 0.0
    %1105 = vmatprep.subr.mxu0 0.0
    %1106 = vmatpush1.msra.mxu0 %v1063
    %1107 = vmatprep.subr.mxu0 0.0
    %1108 = vmatpush1.msra.mxu0 %v1062
    %1109 = vmatprep.subr.mxu0 0.0
    %1110 = vmatpush1.msra.mxu0 %v1061
    %1111 = vmatprep.subr.mxu0 0.0
    %1112 = vmatpush1.msra.mxu0 %v1060
    %1113 = vmatprep.subr.mxu0 0.0
    %1114 = vmatpush2.msra.mxu0 0.0
    %1115 = vmatprep.subr.mxu0 0.0
    %1116 = vmatpush2.msra.mxu0 0.0
    %1117 = vmatprep.subr.mxu0 0.0
    %1118 = vmatpush2.msra.mxu0 0.0
    %1119 = vmatprep.subr.mxu0 0.0
    %1120 = vmatpush2.msra.mxu0 0.0
    %1121 = vmatprep.subr.mxu0 0.0
    %1122 = vmatpush2.msra.mxu0 0.0
    %1123 = vmatprep.subr.mxu0 0.0
    %1124 = vmatpush2.msra.mxu0 0.0
    %1125 = vmatprep.subr.mxu0 0.0
    %1126 = vmatpush2.msra.mxu0 0.0
    %1127 = vmatprep.subr.mxu0 0.0
    %1128 = vmatpush2.msra.mxu0 0.0
    %1129 = vmatprep.subr.mxu0 0.0
    %1130 = vmatpush2.msra.mxu0 0.0
    %1131 = vmatprep.subr.mxu0 0.0
    %1132 = vmatpush2.msra.mxu0 0.0
    %1133 = vmatprep.subr.mxu0 0.0
    %1134 = vmatpush2.msra.mxu0 0.0
    %1135 = vmatprep.subr.mxu0 0.0
    %1136 = vmatpush2.msra.mxu0 0.0
    %1137 = vmatprep.subr.mxu0 0.0
    %1138 = vmatpush2.msra.mxu0 0.0
    %1139 = vmatprep.subr.mxu0 0.0
    %1140 = vmatpush2.msra.mxu0 0.0
    %1141 = vmatprep.subr.mxu0 0.0
    %1142 = vmatpush2.msra.mxu0 0.0
    %1143 = vmatprep.subr.mxu0 0.0
    %1144 = vmatpush2.msra.mxu0 0.0
    %1145 = vmatprep.mubr.f32.mxu0 0.0
    %1146 = vmatmul.mubr.f32.gmra.mxu0 %v1076
    %v1147 = vpop.f32.mrf.mxu0
    %v1148 = vadd.f32 %v1073, %v1147
    %v1149 = vpop.f32.mrf.mxu0
    %1150 = vmatprep.mubr.f32.mxu0 0.0
    %1151 = vmatmul.mubr.f32.gmra.mxu0 %v1079
    %v1152 = vpop.f32.mrf.mxu0
    %v1153 = vadd.f32 %v1073, %v1152
    %v1154 = vpop.f32.mrf.mxu0
    %1155 = vdwg.mxu0
    %1156 = vmatprep.subr.mxu0 0.0
    %1157 = vmatpush1.msra.mxu0 0.0
    %1158 = vmatprep.subr.mxu0 0.0
    %1159 = vmatpush1.msra.mxu0 0.0
    %1160 = vmatprep.subr.mxu0 0.0
    %1161 = vmatpush1.msra.mxu0 0.0
    %1162 = vmatprep.subr.mxu0 0.0
    %1163 = vmatpush1.msra.mxu0 0.0
    %1164 = vmatprep.subr.mxu0 0.0
    %1165 = vmatpush1.msra.mxu0 0.0
    %1166 = vmatprep.subr.mxu0 0.0
    %1167 = vmatpush1.msra.mxu0 0.0
    %1168 = vmatprep.subr.mxu0 0.0
    %1169 = vmatpush1.msra.mxu0 0.0
    %1170 = vmatprep.subr.mxu0 0.0
    %1171 = vmatpush1.msra.mxu0 0.0
    %1172 = vmatprep.subr.mxu0 0.0
    %1173 = vmatpush1.msra.mxu0 0.0
    %1174 = vmatprep.subr.mxu0 0.0
    %1175 = vmatpush1.msra.mxu0 0.0
    %1176 = vmatprep.subr.mxu0 0.0
    %1177 = vmatpush1.msra.mxu0 0.0
    %1178 = vmatprep.subr.mxu0 0.0
    %1179 = vmatpush1.msra.mxu0 0.0
    %1180 = vmatprep.subr.mxu0 0.0
    %1181 = vmatpush1.msra.mxu0 %v1067
    %1182 = vmatprep.subr.mxu0 0.0
    %1183 = vmatpush1.msra.mxu0 %v1066
    %1184 = vmatprep.subr.mxu0 0.0
    %1185 = vmatpush1.msra.mxu0 %v1065
    %1186 = vmatprep.subr.mxu0 0.0
    %1187 = vmatpush1.msra.mxu0 %v1064
    %1188 = vmatprep.subr.mxu0 0.0
    %1189 = vmatpush2.msra.mxu0 0.0
    %1190 = vmatprep.subr.mxu0 0.0
    %1191 = vmatpush2.msra.mxu0 0.0
    %1192 = vmatprep.subr.mxu0 0.0
    %1193 = vmatpush2.msra.mxu0 0.0
    %1194 = vmatprep.subr.mxu0 0.0
    %1195 = vmatpush2.msra.mxu0 0.0
    %1196 = vmatprep.subr.mxu0 0.0
    %1197 = vmatpush2.msra.mxu0 0.0
    %1198 = vmatprep.subr.mxu0 0.0
    %1199 = vmatpush2.msra.mxu0 0.0
    %1200 = vmatprep.subr.mxu0 0.0
    %1201 = vmatpush2.msra.mxu0 0.0
    %1202 = vmatprep.subr.mxu0 0.0
    %1203 = vmatpush2.msra.mxu0 0.0
    %1204 = vmatprep.subr.mxu0 0.0
    %1205 = vmatpush2.msra.mxu0 0.0
    %1206 = vmatprep.subr.mxu0 0.0
    %1207 = vmatpush2.msra.mxu0 0.0
    %1208 = vmatprep.subr.mxu0 0.0
    %1209 = vmatpush2.msra.mxu0 0.0
    %1210 = vmatprep.subr.mxu0 0.0
    %1211 = vmatpush2.msra.mxu0 0.0
    %1212 = vmatprep.subr.mxu0 0.0
    %1213 = vmatpush2.msra.mxu0 0.0
    %1214 = vmatprep.subr.mxu0 0.0
    %1215 = vmatpush2.msra.mxu0 0.0
    %1216 = vmatprep.subr.mxu0 0.0
    %1217 = vmatpush2.msra.mxu0 0.0
    %1218 = vmatprep.subr.mxu0 0.0
    %1219 = vmatpush2.msra.mxu0 0.0
    %1220 = vmatprep.mubr.f32.mxu0 0.0
    %1221 = vmatmul.mubr.f32.gmra.mxu0 %v184
    %v1222 = vpop.f32.mrf.mxu0
    %v1223 = vadd.f32 0.0, %v1222
    %v1224 = vpop.f32.mrf.mxu0
    %1225 = vdwg.mxu0
    %v1226 = vadd.f32 %v1148, %v1223
    %v1227 = vxor.u32 %v1226, 2147483648
    %v1228 = vmul.f32 %v1227, 1.442695
    %v1229 = vpow.pop %v1228
    %v1230 = vadd.f32 %v1229, 1.0
    %v1231 = vrcp.pop %v1230
    %v1232 = vmul.f32 1.0, %v1231
    %v1233 = vtanh.pop %v1226
    %v1234 = vmul.f32 %v1232, 0.0
    %1236 = vrot.lane.b32.xlu0 %v1233, 64
    %v1237 = vpop.permute.xlu0 %1236
    %v1239 = vmul.f32 %v1232, %v1237
    %1241 = vrot.lane.b32.xlu0 %v1239, 32
    %v1242 = vpop.permute.xlu0 %1241
    %v1244 = vadd.f32 %v1234, %v1242
    %v1245 = vtanh.pop %v1244
    %1247 = vrot.lane.b32.xlu0 %v1245, 64
    %v1248 = vpop.permute.xlu0 %1247
    %v1250 = vmul.f32 %v1232, %v1248
    %1252 = vrot.lane.b32.xlu0 %v1250, 32
    %v1253 = vpop.permute.xlu0 %1252
    %v1254 = vsel %vm182, %v1253, 0
    %1256 = vmatprep.subr.mxu0 0.0
    %1257 = vmatpush1.msra.mxu0 0.0
    %1258 = vmatprep.subr.mxu0 0.0
    %1259 = vmatpush1.msra.mxu0 0.0
    %1260 = vmatprep.subr.mxu0 0.0
    %1261 = vmatpush1.msra.mxu0 0.0
    %1262 = vmatprep.subr.mxu0 0.0
    %1263 = vmatpush1.msra.mxu0 0.0
    %1264 = vmatprep.subr.mxu0 0.0
    %1265 = vmatpush1.msra.mxu0 0.0
    %1266 = vmatprep.subr.mxu0 0.0
    %1267 = vmatpush1.msra.mxu0 0.0
    %1268 = vmatprep.subr.mxu0 0.0
    %1269 = vmatpush1.msra.mxu0 0.0
    %1270 = vmatprep.subr.mxu0 0.0
    %1271 = vmatpush1.msra.mxu0 0.0
    %1272 = vmatprep.subr.mxu0 0.0
    %1273 = vmatpush1.msra.mxu0 0.0
    %1274 = vmatprep.subr.mxu0 0.0
    %1275 = vmatpush1.msra.mxu0 0.0
    %1276 = vmatprep.subr.mxu0 0.0
    %1277 = vmatpush1.msra.mxu0 0.0
    %1278 = vmatprep.subr.mxu0 0.0
    %1279 = vmatpush1.msra.mxu0 0.0
    %1280 = vmatprep.subr.mxu0 0.0
    %1281 = vmatpush1.msra.mxu0 %v1067
    %1282 = vmatprep.subr.mxu0 0.0
    %1283 = vmatpush1.msra.mxu0 %v1066
    %1284 = vmatprep.subr.mxu0 0.0
    %1285 = vmatpush1.msra.mxu0 %v1065
    %1286 = vmatprep.subr.mxu0 0.0
    %1287 = vmatpush1.msra.mxu0 %v1064
    %1288 = vmatprep.subr.mxu0 0.0
    %1289 = vmatpush2.msra.mxu0 0.0
    %1290 = vmatprep.subr.mxu0 0.0
    %1291 = vmatpush2.msra.mxu0 0.0
    %1292 = vmatprep.subr.mxu0 0.0
    %1293 = vmatpush2.msra.mxu0 0.0
    %1294 = vmatprep.subr.mxu0 0.0
    %1295 = vmatpush2.msra.mxu0 0.0
    %1296 = vmatprep.subr.mxu0 0.0
    %1297 = vmatpush2.msra.mxu0 0.0
    %1298 = vmatprep.subr.mxu0 0.0
    %1299 = vmatpush2.msra.mxu0 0.0
    %1300 = vmatprep.subr.mxu0 0.0
    %1301 = vmatpush2.msra.mxu0 0.0
    %1302 = vmatprep.subr.mxu0 0.0
    %1303 = vmatpush2.msra.mxu0 0.0
    %1304 = vmatprep.subr.mxu0 0.0
    %1305 = vmatpush2.msra.mxu0 0.0
    %1306 = vmatprep.subr.mxu0 0.0
    %1307 = vmatpush2.msra.mxu0 0.0
    %1308 = vmatprep.subr.mxu0 0.0
    %1309 = vmatpush2.msra.mxu0 0.0
    %1310 = vmatprep.subr.mxu0 0.0
    %1311 = vmatpush2.msra.mxu0 0.0
    %1312 = vmatprep.subr.mxu0 0.0
    %1313 = vmatpush2.msra.mxu0 0.0
    %1314 = vmatprep.subr.mxu0 0.0
    %1315 = vmatpush2.msra.mxu0 0.0
    %1316 = vmatprep.subr.mxu0 0.0
    %1317 = vmatpush2.msra.mxu0 0.0
    %1318 = vmatprep.subr.mxu0 0.0
    %1319 = vmatpush2.msra.mxu0 0.0
    %1320 = vmatprep.mubr.f32.mxu0 0.0
    %1321 = vmatmul.mubr.f32.gmra.mxu0 %v1254
    %v1322 = vpop.f32.mrf.mxu0
    %v1323 = vadd.f32 0.0, %v1322
    %v1324 = vpop.f32.mrf.mxu0
    %1325 = vdwg.mxu0
    %v1327 = vrot.slane %v1323, 6
    %v1329 = vadd.f32 %v1148, %v1327
    %v1330 = vxor.u32 %v1329, 2147483648
    %v1331 = vmul.f32 %v1330, 1.442695
    %v1332 = vpow.pop %v1331
    %v1333 = vadd.f32 %v1332, 1.0
    %v1334 = vrcp.pop %v1333
    %v1335 = vmul.f32 1.0, %v1334
    %v1336 = vtanh.pop %v1329
    %v1338 = vrot.slane %v1244, 6
    %v1340 = vmul.f32 %v1335, %v1338
    %1342 = vrot.lane.b32.xlu0 %v1336, 64
    %v1343 = vpop.permute.xlu0 %1342
    %v1345 = vmul.f32 %v1335, %v1343
    %1347 = vrot.lane.b32.xlu0 %v1345, 32
    %v1348 = vpop.permute.xlu0 %1347
    %v1350 = vadd.f32 %v1340, %v1348
    %v1351 = vtanh.pop %v1350
    %1353 = vrot.lane.b32.xlu0 %v1351, 64
    %v1354 = vpop.permute.xlu0 %1353
    %v1356 = vmul.f32 %v1335, %v1354
    %v1358 = vrot.slane %v1356, 2
    %1359 = vrot.lane.b32.xlu0 %v1358, 32
    %v1360 = vpop.permute.xlu0 %1359
    %v1361 = vsel %vm182, %v1360, 0
    %1363 = vmatprep.subr.mxu0 0.0
    %1364 = vmatpush1.msra.mxu0 0.0
    %1365 = vmatprep.subr.mxu0 0.0
    %1366 = vmatpush1.msra.mxu0 0.0
    %1367 = vmatprep.subr.mxu0 0.0
    %1368 = vmatpush1.msra.mxu0 0.0
    %1369 = vmatprep.subr.mxu0 0.0
    %1370 = vmatpush1.msra.mxu0 0.0
    %1371 = vmatprep.subr.mxu0 0.0
    %1372 = vmatpush1.msra.mxu0 0.0
    %1373 = vmatprep.subr.mxu0 0.0
    %1374 = vmatpush1.msra.mxu0 0.0
    %1375 = vmatprep.subr.mxu0 0.0
    %1376 = vmatpush1.msra.mxu0 0.0
    %1377 = vmatprep.subr.mxu0 0.0
    %1378 = vmatpush1.msra.mxu0 0.0
    %1379 = vmatprep.subr.mxu0 0.0
    %1380 = vmatpush1.msra.mxu0 0.0
    %1381 = vmatprep.subr.mxu0 0.0
    %1382 = vmatpush1.msra.mxu0 0.0
    %1383 = vmatprep.subr.mxu0 0.0
    %1384 = vmatpush1.msra.mxu0 0.0
    %1385 = vmatprep.subr.mxu0 0.0
    %1386 = vmatpush1.msra.mxu0 0.0
    %1387 = vmatprep.subr.mxu0 0.0
    %1388 = vmatpush1.msra.mxu0 %v1067
    %1389 = vmatprep.subr.mxu0 0.0
    %1390 = vmatpush1.msra.mxu0 %v1066
    %1391 = vmatprep.subr.mxu0 0.0
    %1392 = vmatpush1.msra.mxu0 %v1065
    %1393 = vmatprep.subr.mxu0 0.0
    %1394 = vmatpush1.msra.mxu0 %v1064
    %1395 = vmatprep.subr.mxu0 0.0
    %1396 = vmatpush2.msra.mxu0 0.0
    %1397 = vmatprep.subr.mxu0 0.0
    %1398 = vmatpush2.msra.mxu0 0.0
    %1399 = vmatprep.subr.mxu0 0.0
    %1400 = vmatpush2.msra.mxu0 0.0
    %1401 = vmatprep.subr.mxu0 0.0
    %1402 = vmatpush2.msra.mxu0 0.0
    %1403 = vmatprep.subr.mxu0 0.0
    %1404 = vmatpush2.msra.mxu0 0.0
    %1405 = vmatprep.subr.mxu0 0.0
    %1406 = vmatpush2.msra.mxu0 0.0
    %1407 = vmatprep.subr.mxu0 0.0
    %1408 = vmatpush2.msra.mxu0 0.0
    %1409 = vmatprep.subr.mxu0 0.0
    %1410 = vmatpush2.msra.mxu0 0.0
    %1411 = vmatprep.subr.mxu0 0.0
    %1412 = vmatpush2.msra.mxu0 0.0
    %1413 = vmatprep.subr.mxu0 0.0
    %1414 = vmatpush2.msra.mxu0 0.0
    %1415 = vmatprep.subr.mxu0 0.0
    %1416 = vmatpush2.msra.mxu0 0.0
    %1417 = vmatprep.subr.mxu0 0.0
    %1418 = vmatpush2.msra.mxu0 0.0
    %1419 = vmatprep.subr.mxu0 0.0
    %1420 = vmatpush2.msra.mxu0 0.0
    %1421 = vmatprep.subr.mxu0 0.0
    %1422 = vmatpush2.msra.mxu0 0.0
    %1423 = vmatprep.subr.mxu0 0.0
    %1424 = vmatpush2.msra.mxu0 0.0
    %1425 = vmatprep.subr.mxu0 0.0
    %1426 = vmatpush2.msra.mxu0 0.0
    %1427 = vmatprep.mubr.f32.mxu0 0.0
    %1428 = vmatmul.mubr.f32.gmra.mxu0 %v1361
    %v1429 = vpop.f32.mrf.mxu0
    %v1430 = vadd.f32 0.0, %v1429
    %v1431 = vpop.f32.mrf.mxu0
    %1432 = vdwg.mxu0
    %v1434 = vrot.slane %v1430, 4
    %v1436 = vadd.f32 %v1148, %v1434
    %v1437 = vxor.u32 %v1436, 2147483648
    %v1438 = vmul.f32 %v1437, 1.442695
    %v1439 = vpow.pop %v1438
    %v1440 = vadd.f32 %v1439, 1.0
    %v1441 = vrcp.pop %v1440
    %v1442 = vmul.f32 1.0, %v1441
    %v1443 = vtanh.pop %v1436
    %v1445 = vrot.slane %v1350, 6
    %v1447 = vmul.f32 %v1442, %v1445
    %1449 = vrot.lane.b32.xlu0 %v1443, 64
    %v1450 = vpop.permute.xlu0 %1449
    %v1452 = vmul.f32 %v1442, %v1450
    %1454 = vrot.lane.b32.xlu0 %v1452, 32
    %v1455 = vpop.permute.xlu0 %1454
    %v1457 = vadd.f32 %v1447, %v1455
    %v1458 = vtanh.pop %v1457
    %1460 = vrot.lane.b32.xlu0 %v1458, 64
    %v1461 = vpop.permute.xlu0 %1460
    %v1463 = vmul.f32 %v1442, %v1461
    %v1465 = vrot.slane %v1463, 4
    %1466 = vrot.lane.b32.xlu0 %v1465, 32
    %v1467 = vpop.permute.xlu0 %1466
    %v1468 = vsel %vm182, %v1467, 0
    %1470 = vmatprep.subr.mxu0 0.0
    %1471 = vmatpush1.msra.mxu0 0.0
    %1472 = vmatprep.subr.mxu0 0.0
    %1473 = vmatpush1.msra.mxu0 0.0
    %1474 = vmatprep.subr.mxu0 0.0
    %1475 = vmatpush1.msra.mxu0 0.0
    %1476 = vmatprep.subr.mxu0 0.0
    %1477 = vmatpush1.msra.mxu0 0.0
    %1478 = vmatprep.subr.mxu0 0.0
    %1479 = vmatpush1.msra.mxu0 0.0
    %1480 = vmatprep.subr.mxu0 0.0
    %1481 = vmatpush1.msra.mxu0 0.0
    %1482 = vmatprep.subr.mxu0 0.0
    %1483 = vmatpush1.msra.mxu0 0.0
    %1484 = vmatprep.subr.mxu0 0.0
    %1485 = vmatpush1.msra.mxu0 0.0
    %1486 = vmatprep.subr.mxu0 0.0
    %1487 = vmatpush1.msra.mxu0 0.0
    %1488 = vmatprep.subr.mxu0 0.0
    %1489 = vmatpush1.msra.mxu0 0.0
    %1490 = vmatprep.subr.mxu0 0.0
    %1491 = vmatpush1.msra.mxu0 0.0
    %1492 = vmatprep.subr.mxu0 0.0
    %1493 = vmatpush1.msra.mxu0 0.0
    %1494 = vmatprep.subr.mxu0 0.0
    %1495 = vmatpush1.msra.mxu0 %v1067
    %1496 = vmatprep.subr.mxu0 0.0
    %1497 = vmatpush1.msra.mxu0 %v1066
    %1498 = vmatprep.subr.mxu0 0.0
    %1499 = vmatpush1.msra.mxu0 %v1065
    %1500 = vmatprep.subr.mxu0 0.0
    %1501 = vmatpush1.msra.mxu0 %v1064
    %1502 = vmatprep.subr.mxu0 0.0
    %1503 = vmatpush2.msra.mxu0 0.0
    %1504 = vmatprep.subr.mxu0 0.0
    %1505 = vmatpush2.msra.mxu0 0.0
    %1506 = vmatprep.subr.mxu0 0.0
    %1507 = vmatpush2.msra.mxu0 0.0
    %1508 = vmatprep.subr.mxu0 0.0
    %1509 = vmatpush2.msra.mxu0 0.0
    %1510 = vmatprep.subr.mxu0 0.0
    %1511 = vmatpush2.msra.mxu0 0.0
    %1512 = vmatprep.subr.mxu0 0.0
    %1513 = vmatpush2.msra.mxu0 0.0
    %1514 = vmatprep.subr.mxu0 0.0
    %1515 = vmatpush2.msra.mxu0 0.0
    %1516 = vmatprep.subr.mxu0 0.0
    %1517 = vmatpush2.msra.mxu0 0.0
    %1518 = vmatprep.subr.mxu0 0.0
    %1519 = vmatpush2.msra.mxu0 0.0
    %1520 = vmatprep.subr.mxu0 0.0
    %1521 = vmatpush2.msra.mxu0 0.0
    %1522 = vmatprep.subr.mxu0 0.0
    %1523 = vmatpush2.msra.mxu0 0.0
    %1524 = vmatprep.subr.mxu0 0.0
    %1525 = vmatpush2.msra.mxu0 0.0
    %1526 = vmatprep.subr.mxu0 0.0
    %1527 = vmatpush2.msra.mxu0 0.0
    %1528 = vmatprep.subr.mxu0 0.0
    %1529 = vmatpush2.msra.mxu0 0.0
    %1530 = vmatprep.subr.mxu0 0.0
    %1531 = vmatpush2.msra.mxu0 0.0
    %1532 = vmatprep.subr.mxu0 0.0
    %1533 = vmatpush2.msra.mxu0 0.0
    %1534 = vmatprep.mubr.f32.mxu0 0.0
    %1535 = vmatmul.mubr.f32.gmra.mxu0 %v1468
    %v1536 = vpop.f32.mrf.mxu0
    %v1537 = vadd.f32 0.0, %v1536
    %v1538 = vpop.f32.mrf.mxu0
    %1539 = vdwg.mxu0
    %v1541 = vrot.slane %v1537, 2
    %v1543 = vadd.f32 %v1148, %v1541
    %v1544 = vxor.u32 %v1543, 2147483648
    %v1545 = vmul.f32 %v1544, 1.442695
    %v1546 = vpow.pop %v1545
    %v1547 = vadd.f32 %v1546, 1.0
    %v1548 = vrcp.pop %v1547
    %v1549 = vmul.f32 1.0, %v1548
    %v1550 = vtanh.pop %v1543
    %v1552 = vrot.slane %v1457, 6
    %v1554 = vmul.f32 %v1549, %v1552
    %1556 = vrot.lane.b32.xlu0 %v1550, 64
    %v1557 = vpop.permute.xlu0 %1556
    %v1559 = vmul.f32 %v1549, %v1557
    %1561 = vrot.lane.b32.xlu0 %v1559, 32
    %v1562 = vpop.permute.xlu0 %1561
    %v1564 = vadd.f32 %v1554, %v1562
    %v1565 = vtanh.pop %v1564
    %1567 = vrot.lane.b32.xlu0 %v1565, 64
    %v1568 = vpop.permute.xlu0 %1567
    %v1570 = vmul.f32 %v1549, %v1568
    %v1572 = vrot.slane %v1570, 6
    %1573 = vrot.lane.b32.xlu0 %v1572, 32
    %v1574 = vpop.permute.xlu0 %1573
    %v1575 = vsel %vm182, %v1574, 0
    %1577 = vmatprep.subr.mxu0 0.0
    %1578 = vmatpush1.msra.mxu0 0.0
    %1579 = vmatprep.subr.mxu0 0.0
    %1580 = vmatpush1.msra.mxu0 0.0
    %1581 = vmatprep.subr.mxu0 0.0
    %1582 = vmatpush1.msra.mxu0 0.0
    %1583 = vmatprep.subr.mxu0 0.0
    %1584 = vmatpush1.msra.mxu0 0.0
    %1585 = vmatprep.subr.mxu0 0.0
    %1586 = vmatpush1.msra.mxu0 0.0
    %1587 = vmatprep.subr.mxu0 0.0
    %1588 = vmatpush1.msra.mxu0 0.0
    %1589 = vmatprep.subr.mxu0 0.0
    %1590 = vmatpush1.msra.mxu0 0.0
    %1591 = vmatprep.subr.mxu0 0.0
    %1592 = vmatpush1.msra.mxu0 0.0
    %1593 = vmatprep.subr.mxu0 0.0
    %1594 = vmatpush1.msra.mxu0 0.0
    %1595 = vmatprep.subr.mxu0 0.0
    %1596 = vmatpush1.msra.mxu0 0.0
    %1597 = vmatprep.subr.mxu0 0.0
    %1598 = vmatpush1.msra.mxu0 0.0
    %1599 = vmatprep.subr.mxu0 0.0
    %1600 = vmatpush1.msra.mxu0 0.0
    %1601 = vmatprep.subr.mxu0 0.0
    %1602 = vmatpush1.msra.mxu0 %v1067
    %1603 = vmatprep.subr.mxu0 0.0
    %1604 = vmatpush1.msra.mxu0 %v1066
    %1605 = vmatprep.subr.mxu0 0.0
    %1606 = vmatpush1.msra.mxu0 %v1065
    %1607 = vmatprep.subr.mxu0 0.0
    %1608 = vmatpush1.msra.mxu0 %v1064
    %1609 = vmatprep.subr.mxu0 0.0
    %1610 = vmatpush2.msra.mxu0 0.0
    %1611 = vmatprep.subr.mxu0 0.0
    %1612 = vmatpush2.msra.mxu0 0.0
    %1613 = vmatprep.subr.mxu0 0.0
    %1614 = vmatpush2.msra.mxu0 0.0
    %1615 = vmatprep.subr.mxu0 0.0
    %1616 = vmatpush2.msra.mxu0 0.0
    %1617 = vmatprep.subr.mxu0 0.0
    %1618 = vmatpush2.msra.mxu0 0.0
    %1619 = vmatprep.subr.mxu0 0.0
    %1620 = vmatpush2.msra.mxu0 0.0
    %1621 = vmatprep.subr.mxu0 0.0
    %1622 = vmatpush2.msra.mxu0 0.0
    %1623 = vmatprep.subr.mxu0 0.0
    %1624 = vmatpush2.msra.mxu0 0.0
    %1625 = vmatprep.subr.mxu0 0.0
    %1626 = vmatpush2.msra.mxu0 0.0
    %1627 = vmatprep.subr.mxu0 0.0
    %1628 = vmatpush2.msra.mxu0 0.0
    %1629 = vmatprep.subr.mxu0 0.0
    %1630 = vmatpush2.msra.mxu0 0.0
    %1631 = vmatprep.subr.mxu0 0.0
    %1632 = vmatpush2.msra.mxu0 0.0
    %1633 = vmatprep.subr.mxu0 0.0
    %1634 = vmatpush2.msra.mxu0 0.0
    %1635 = vmatprep.subr.mxu0 0.0
    %1636 = vmatpush2.msra.mxu0 0.0
    %1637 = vmatprep.subr.mxu0 0.0
    %1638 = vmatpush2.msra.mxu0 0.0
    %1639 = vmatprep.subr.mxu0 0.0
    %1640 = vmatpush2.msra.mxu0 0.0
    %1641 = vmatprep.mubr.f32.mxu0 0.0
    %1642 = vmatmul.mubr.f32.gmra.mxu0 %v1575
    %v1643 = vpop.f32.mrf.mxu0
    %v1644 = vadd.f32 0.0, %v1643
    %v1645 = vpop.f32.mrf.mxu0
    %1646 = vdwg.mxu0
    %v1647 = vadd.f32 %v1153, %v1644
    %v1648 = vxor.u32 %v1647, 2147483648
    %v1649 = vmul.f32 %v1648, 1.442695
    %v1650 = vpow.pop %v1649
    %v1651 = vadd.f32 %v1650, 1.0
    %v1652 = vrcp.pop %v1651
    %v1653 = vmul.f32 1.0, %v1652
    %v1654 = vtanh.pop %v1647
    %v1656 = vrot.slane %v1564, 6
    %v1658 = vmul.f32 %v1653, %v1656
    %1660 = vrot.lane.b32.xlu0 %v1654, 64
    %v1661 = vpop.permute.xlu0 %1660
    %v1663 = vmul.f32 %v1653, %v1661
    %1665 = vrot.lane.b32.xlu0 %v1663, 32
    %v1666 = vpop.permute.xlu0 %1665
    %v1668 = vadd.f32 %v1658, %v1666
    %v1669 = vtanh.pop %v1668
    %1671 = vrot.lane.b32.xlu0 %v1669, 64
    %v1672 = vpop.permute.xlu0 %1671
    %v1674 = vmul.f32 %v1653, %v1672
    %1676 = vrot.lane.b32.xlu0 %v1674, 32
    %v1677 = vpop.permute.xlu0 %1676
    %v1678 = vsel %vm182, %v1677, 0
    %1680 = vmatprep.subr.mxu0 0.0
    %1681 = vmatpush1.msra.mxu0 0.0
    %1682 = vmatprep.subr.mxu0 0.0
    %1683 = vmatpush1.msra.mxu0 0.0
    %1684 = vmatprep.subr.mxu0 0.0
    %1685 = vmatpush1.msra.mxu0 0.0
    %1686 = vmatprep.subr.mxu0 0.0
    %1687 = vmatpush1.msra.mxu0 0.0
    %1688 = vmatprep.subr.mxu0 0.0
    %1689 = vmatpush1.msra.mxu0 0.0
    %1690 = vmatprep.subr.mxu0 0.0
    %1691 = vmatpush1.msra.mxu0 0.0
    %1692 = vmatprep.subr.mxu0 0.0
    %1693 = vmatpush1.msra.mxu0 0.0
    %1694 = vmatprep.subr.mxu0 0.0
    %1695 = vmatpush1.msra.mxu0 0.0
    %1696 = vmatprep.subr.mxu0 0.0
    %1697 = vmatpush1.msra.mxu0 0.0
    %1698 = vmatprep.subr.mxu0 0.0
    %1699 = vmatpush1.msra.mxu0 0.0
    %1700 = vmatprep.subr.mxu0 0.0
    %1701 = vmatpush1.msra.mxu0 0.0
    %1702 = vmatprep.subr.mxu0 0.0
    %1703 = vmatpush1.msra.mxu0 0.0
    %1704 = vmatprep.subr.mxu0 0.0
    %1705 = vmatpush1.msra.mxu0 %v1067
    %1706 = vmatprep.subr.mxu0 0.0
    %1707 = vmatpush1.msra.mxu0 %v1066
    %1708 = vmatprep.subr.mxu0 0.0
    %1709 = vmatpush1.msra.mxu0 %v1065
    %1710 = vmatprep.subr.mxu0 0.0
    %1711 = vmatpush1.msra.mxu0 %v1064
    %1712 = vmatprep.subr.mxu0 0.0
    %1713 = vmatpush2.msra.mxu0 0.0
    %1714 = vmatprep.subr.mxu0 0.0
    %1715 = vmatpush2.msra.mxu0 0.0
    %1716 = vmatprep.subr.mxu0 0.0
    %1717 = vmatpush2.msra.mxu0 0.0
    %1718 = vmatprep.subr.mxu0 0.0
    %1719 = vmatpush2.msra.mxu0 0.0
    %1720 = vmatprep.subr.mxu0 0.0
    %1721 = vmatpush2.msra.mxu0 0.0
    %1722 = vmatprep.subr.mxu0 0.0
    %1723 = vmatpush2.msra.mxu0 0.0
    %1724 = vmatprep.subr.mxu0 0.0
    %1725 = vmatpush2.msra.mxu0 0.0
    %1726 = vmatprep.subr.mxu0 0.0
    %1727 = vmatpush2.msra.mxu0 0.0
    %1728 = vmatprep.subr.mxu0 0.0
    %1729 = vmatpush2.msra.mxu0 0.0
    %1730 = vmatprep.subr.mxu0 0.0
    %1731 = vmatpush2.msra.mxu0 0.0
    %1732 = vmatprep.subr.mxu0 0.0
    %1733 = vmatpush2.msra.mxu0 0.0
    %1734 = vmatprep.subr.mxu0 0.0
    %1735 = vmatpush2.msra.mxu0 0.0
    %1736 = vmatprep.subr.mxu0 0.0
    %1737 = vmatpush2.msra.mxu0 0.0
    %1738 = vmatprep.subr.mxu0 0.0
    %1739 = vmatpush2.msra.mxu0 0.0
    %1740 = vmatprep.subr.mxu0 0.0
    %1741 = vmatpush2.msra.mxu0 0.0
    %1742 = vmatprep.subr.mxu0 0.0
    %1743 = vmatpush2.msra.mxu0 0.0
    %1744 = vmatprep.mubr.f32.mxu0 0.0
    %1745 = vmatmul.mubr.f32.gmra.mxu0 %v1678
    %v1746 = vpop.f32.mrf.mxu0
    %v1747 = vadd.f32 0.0, %v1746
    %v1748 = vpop.f32.mrf.mxu0
    %1749 = vdwg.mxu0
    %v1751 = vrot.slane %v1747, 6
    %v1753 = vadd.f32 %v1153, %v1751
    %v1754 = vxor.u32 %v1753, 2147483648
    %v1755 = vmul.f32 %v1754, 1.442695
    %v1756 = vpow.pop %v1755
    %v1757 = vadd.f32 %v1756, 1.0
    %v1758 = vrcp.pop %v1757
    %v1759 = vmul.f32 1.0, %v1758
    %v1760 = vtanh.pop %v1753
    %v1762 = vrot.slane %v1668, 6
    %v1764 = vmul.f32 %v1759, %v1762
    %1766 = vrot.lane.b32.xlu0 %v1760, 64
    %v1767 = vpop.permute.xlu0 %1766
    %v1769 = vmul.f32 %v1759, %v1767
    %1771 = vrot.lane.b32.xlu0 %v1769, 32
    %v1772 = vpop.permute.xlu0 %1771
    %v1774 = vadd.f32 %v1764, %v1772
    %v1775 = vtanh.pop %v1774
    %1777 = vrot.lane.b32.xlu0 %v1775, 64
    %v1778 = vpop.permute.xlu0 %1777
    %v1780 = vmul.f32 %v1759, %v1778
    %v1782 = vrot.slane %v1780, 2
    %1783 = vrot.lane.b32.xlu0 %v1782, 32
    %v1784 = vpop.permute.xlu0 %1783
    %v1785 = vsel %vm182, %v1784, 0
    %1787 = vmatprep.subr.mxu0 0.0
    %1788 = vmatpush1.msra.mxu0 0.0
    %1789 = vmatprep.subr.mxu0 0.0
    %1790 = vmatpush1.msra.mxu0 0.0
    %1791 = vmatprep.subr.mxu0 0.0
    %1792 = vmatpush1.msra.mxu0 0.0
    %1793 = vmatprep.subr.mxu0 0.0
    %1794 = vmatpush1.msra.mxu0 0.0
    %1795 = vmatprep.subr.mxu0 0.0
    %1796 = vmatpush1.msra.mxu0 0.0
    %1797 = vmatprep.subr.mxu0 0.0
    %1798 = vmatpush1.msra.mxu0 0.0
    %1799 = vmatprep.subr.mxu0 0.0
    %1800 = vmatpush1.msra.mxu0 0.0
    %1801 = vmatprep.subr.mxu0 0.0
    %1802 = vmatpush1.msra.mxu0 0.0
    %1803 = vmatprep.subr.mxu0 0.0
    %1804 = vmatpush1.msra.mxu0 0.0
    %1805 = vmatprep.subr.mxu0 0.0
    %1806 = vmatpush1.msra.mxu0 0.0
    %1807 = vmatprep.subr.mxu0 0.0
    %1808 = vmatpush1.msra.mxu0 0.0
    %1809 = vmatprep.subr.mxu0 0.0
    %1810 = vmatpush1.msra.mxu0 0.0
    %1811 = vmatprep.subr.mxu0 0.0
    %1812 = vmatpush1.msra.mxu0 %v1067
    %1813 = vmatprep.subr.mxu0 0.0
    %1814 = vmatpush1.msra.mxu0 %v1066
    %1815 = vmatprep.subr.mxu0 0.0
    %1816 = vmatpush1.msra.mxu0 %v1065
    %1817 = vmatprep.subr.mxu0 0.0
    %1818 = vmatpush1.msra.mxu0 %v1064
    %1819 = vmatprep.subr.mxu0 0.0
    %1820 = vmatpush2.msra.mxu0 0.0
    %1821 = vmatprep.subr.mxu0 0.0
    %1822 = vmatpush2.msra.mxu0 0.0
    %1823 = vmatprep.subr.mxu0 0.0
    %1824 = vmatpush2.msra.mxu0 0.0
    %1825 = vmatprep.subr.mxu0 0.0
    %1826 = vmatpush2.msra.mxu0 0.0
    %1827 = vmatprep.subr.mxu0 0.0
    %1828 = vmatpush2.msra.mxu0 0.0
    %1829 = vmatprep.subr.mxu0 0.0
    %1830 = vmatpush2.msra.mxu0 0.0
    %1831 = vmatprep.subr.mxu0 0.0
    %1832 = vmatpush2.msra.mxu0 0.0
    %1833 = vmatprep.subr.mxu0 0.0
    %1834 = vmatpush2.msra.mxu0 0.0
    %1835 = vmatprep.subr.mxu0 0.0
    %1836 = vmatpush2.msra.mxu0 0.0
    %1837 = vmatprep.subr.mxu0 0.0
    %1838 = vmatpush2.msra.mxu0 0.0
    %1839 = vmatprep.subr.mxu0 0.0
    %1840 = vmatpush2.msra.mxu0 0.0
    %1841 = vmatprep.subr.mxu0 0.0
    %1842 = vmatpush2.msra.mxu0 0.0
    %1843 = vmatprep.subr.mxu0 0.0
    %1844 = vmatpush2.msra.mxu0 0.0
    %1845 = vmatprep.subr.mxu0 0.0
    %1846 = vmatpush2.msra.mxu0 0.0
    %1847 = vmatprep.subr.mxu0 0.0
    %1848 = vmatpush2.msra.mxu0 0.0
    %1849 = vmatprep.subr.mxu0 0.0
    %1850 = vmatpush2.msra.mxu0 0.0
    %1851 = vmatprep.mubr.f32.mxu0 0.0
    %1852 = vmatmul.mubr.f32.gmra.mxu0 %v1785
    %v1853 = vpop.f32.mrf.mxu0
    %v1854 = vadd.f32 0.0, %v1853
    %v1855 = vpop.f32.mrf.mxu0
    %1856 = vdwg.mxu0
    %v1858 = vrot.slane %v1854, 4
    %v1860 = vadd.f32 %v1153, %v1858
    %v1861 = vxor.u32 %v1860, 2147483648
    %v1862 = vmul.f32 %v1861, 1.442695
    %v1863 = vpow.pop %v1862
    %v1864 = vadd.f32 %v1863, 1.0
    %v1865 = vrcp.pop %v1864
    %v1866 = vmul.f32 1.0, %v1865
    %v1867 = vtanh.pop %v1860
    %v1869 = vrot.slane %v1774, 6
    %v1871 = vmul.f32 %v1866, %v1869
    %1873 = vrot.lane.b32.xlu0 %v1867, 64
    %v1874 = vpop.permute.xlu0 %1873
    %v1876 = vmul.f32 %v1866, %v1874
    %1878 = vrot.lane.b32.xlu0 %v1876, 32
    %v1879 = vpop.permute.xlu0 %1878
    %v1881 = vadd.f32 %v1871, %v1879
    %v1882 = vtanh.pop %v1881
    %1884 = vrot.lane.b32.xlu0 %v1882, 64
    %v1885 = vpop.permute.xlu0 %1884
    %v1887 = vmul.f32 %v1866, %v1885
    %v1889 = vrot.slane %v1887, 4
    %1890 = vrot.lane.b32.xlu0 %v1889, 32
    %v1891 = vpop.permute.xlu0 %1890
    %v1892 = vsel %vm182, %v1891, 0
    %1894 = vmatprep.subr.mxu0 0.0
    %1895 = vmatpush1.msra.mxu0 0.0
    %1896 = vmatprep.subr.mxu0 0.0
    %1897 = vmatpush1.msra.mxu0 0.0
    %1898 = vmatprep.subr.mxu0 0.0
    %1899 = vmatpush1.msra.mxu0 0.0
    %1900 = vmatprep.subr.mxu0 0.0
    %1901 = vmatpush1.msra.mxu0 0.0
    %1902 = vmatprep.subr.mxu0 0.0
    %1903 = vmatpush1.msra.mxu0 0.0
    %1904 = vmatprep.subr.mxu0 0.0
    %1905 = vmatpush1.msra.mxu0 0.0
    %1906 = vmatprep.subr.mxu0 0.0
    %1907 = vmatpush1.msra.mxu0 0.0
    %1908 = vmatprep.subr.mxu0 0.0
    %1909 = vmatpush1.msra.mxu0 0.0
    %1910 = vmatprep.subr.mxu0 0.0
    %1911 = vmatpush1.msra.mxu0 0.0
    %1912 = vmatprep.subr.mxu0 0.0
    %1913 = vmatpush1.msra.mxu0 0.0
    %1914 = vmatprep.subr.mxu0 0.0
    %1915 = vmatpush1.msra.mxu0 0.0
    %1916 = vmatprep.subr.mxu0 0.0
    %1917 = vmatpush1.msra.mxu0 0.0
    %1918 = vmatprep.subr.mxu0 0.0
    %1919 = vmatpush1.msra.mxu0 %v1067
    %1920 = vmatprep.subr.mxu0 0.0
    %1921 = vmatpush1.msra.mxu0 %v1066
    %1922 = vmatprep.subr.mxu0 0.0
    %1923 = vmatpush1.msra.mxu0 %v1065
    %1924 = vmatprep.subr.mxu0 0.0
    %1925 = vmatpush1.msra.mxu0 %v1064
    %1926 = vmatprep.subr.mxu0 0.0
    %1927 = vmatpush2.msra.mxu0 0.0
    %1928 = vmatprep.subr.mxu0 0.0
    %1929 = vmatpush2.msra.mxu0 0.0
    %1930 = vmatprep.subr.mxu0 0.0
    %1931 = vmatpush2.msra.mxu0 0.0
    %1932 = vmatprep.subr.mxu0 0.0
    %1933 = vmatpush2.msra.mxu0 0.0
    %1934 = vmatprep.subr.mxu0 0.0
    %1935 = vmatpush2.msra.mxu0 0.0
    %1936 = vmatprep.subr.mxu0 0.0
    %1937 = vmatpush2.msra.mxu0 0.0
    %1938 = vmatprep.subr.mxu0 0.0
    %1939 = vmatpush2.msra.mxu0 0.0
    %1940 = vmatprep.subr.mxu0 0.0
    %1941 = vmatpush2.msra.mxu0 0.0
    %1942 = vmatprep.subr.mxu0 0.0
    %1943 = vmatpush2.msra.mxu0 0.0
    %1944 = vmatprep.subr.mxu0 0.0
    %1945 = vmatpush2.msra.mxu0 0.0
    %1946 = vmatprep.subr.mxu0 0.0
    %1947 = vmatpush2.msra.mxu0 0.0
    %1948 = vmatprep.subr.mxu0 0.0
    %1949 = vmatpush2.msra.mxu0 0.0
    %1950 = vmatprep.subr.mxu0 0.0
    %1951 = vmatpush2.msra.mxu0 0.0
    %1952 = vmatprep.subr.mxu0 0.0
    %1953 = vmatpush2.msra.mxu0 0.0
    %1954 = vmatprep.subr.mxu0 0.0
    %1955 = vmatpush2.msra.mxu0 0.0
    %1956 = vmatprep.subr.mxu0 0.0
    %1957 = vmatpush2.msra.mxu0 0.0
    %1958 = vmatprep.mubr.f32.mxu0 0.0
    %1959 = vmatmul.mubr.f32.gmra.mxu0 %v1892
    %v1960 = vpop.f32.mrf.mxu0
    %v1961 = vadd.f32 0.0, %v1960
    %v1962 = vpop.f32.mrf.mxu0
    %1963 = vdwg.mxu0
    %v1965 = vrot.slane %v1961, 2
    %v1967 = vadd.f32 %v1153, %v1965
    %v1968 = vxor.u32 %v1967, 2147483648
    %v1969 = vmul.f32 %v1968, 1.442695
    %v1970 = vpow.pop %v1969
    %v1971 = vadd.f32 %v1970, 1.0
    %v1972 = vrcp.pop %v1971
    %v1973 = vmul.f32 1.0, %v1972
    %v1974 = vtanh.pop %v1967
    %v1976 = vrot.slane %v1881, 6
    %v1978 = vmul.f32 %v1973, %v1976
    %1980 = vrot.lane.b32.xlu0 %v1974, 64
    %v1981 = vpop.permute.xlu0 %1980
    %v1983 = vmul.f32 %v1973, %v1981
    %1985 = vrot.lane.b32.xlu0 %v1983, 32
    %v1986 = vpop.permute.xlu0 %1985
    %v1988 = vadd.f32 %v1978, %v1986
    %v1989 = vtanh.pop %v1988
    %1991 = vrot.lane.b32.xlu0 %v1989, 64
    %v1992 = vpop.permute.xlu0 %1991
    %v1994 = vmul.f32 %v1973, %v1992
    %v1995 = vld [vmem:[%s7] sm:$0xff]
    %v1996 = vld [vmem:[%s7 + $0x8] sm:$0xff]
    %v1997 = vld [vmem:[%s7 + $0x10] sm:$0xff]
    %v1998 = vld [vmem:[%s7 + $0x18] sm:$0xff]
    %v1999 = vld [vmem:[%s8] sm:$0x1]
    %v2001 = vlaneseq
    %v2002 = vshrl.u32 %v2001, 7
    %v2003 = vsub.s32 0, %v2002
    %v2004 = vrot.slane %v1999, %v2003
    %v2007 = vrot.slane %v1994, 6
    %2008 = vrot.lane.b32.xlu0 %v2007, 32
    %v2009 = vpop.permute.xlu0 %2008
    %v2010 = vsel %vm182, %v2009, 0
    %2012 = vmatprep.subr.mxu0 0.0
    %2013 = vmatpush1.msra.mxu0 0.0
    %2014 = vmatprep.subr.mxu0 0.0
    %2015 = vmatpush1.msra.mxu0 0.0
    %2016 = vmatprep.subr.mxu0 0.0
    %2017 = vmatpush1.msra.mxu0 0.0
    %2018 = vmatprep.subr.mxu0 0.0
    %2019 = vmatpush1.msra.mxu0 0.0
    %2020 = vmatprep.subr.mxu0 0.0
    %2021 = vmatpush1.msra.mxu0 0.0
    %2022 = vmatprep.subr.mxu0 0.0
    %2023 = vmatpush1.msra.mxu0 0.0
    %2024 = vmatprep.subr.mxu0 0.0
    %2025 = vmatpush1.msra.mxu0 0.0
    %2026 = vmatprep.subr.mxu0 0.0
    %2027 = vmatpush1.msra.mxu0 0.0
    %2028 = vmatprep.subr.mxu0 0.0
    %2029 = vmatpush1.msra.mxu0 0.0
    %2030 = vmatprep.subr.mxu0 0.0
    %2031 = vmatpush1.msra.mxu0 0.0
    %2032 = vmatprep.subr.mxu0 0.0
    %2033 = vmatpush1.msra.mxu0 0.0
    %2034 = vmatprep.subr.mxu0 0.0
    %2035 = vmatpush1.msra.mxu0 0.0
    %2036 = vmatprep.subr.mxu0 0.0
    %2037 = vmatpush1.msra.mxu0 %v1998
    %2038 = vmatprep.subr.mxu0 0.0
    %2039 = vmatpush1.msra.mxu0 %v1997
    %2040 = vmatprep.subr.mxu0 0.0
    %2041 = vmatpush1.msra.mxu0 %v1996
    %2042 = vmatprep.subr.mxu0 0.0
    %2043 = vmatpush1.msra.mxu0 %v1995
    %2044 = vmatprep.subr.mxu0 0.0
    %2045 = vmatpush2.msra.mxu0 0.0
    %2046 = vmatprep.subr.mxu0 0.0
    %2047 = vmatpush2.msra.mxu0 0.0
    %2048 = vmatprep.subr.mxu0 0.0
    %2049 = vmatpush2.msra.mxu0 0.0
    %2050 = vmatprep.subr.mxu0 0.0
    %2051 = vmatpush2.msra.mxu0 0.0
    %2052 = vmatprep.subr.mxu0 0.0
    %2053 = vmatpush2.msra.mxu0 0.0
    %2054 = vmatprep.subr.mxu0 0.0
    %2055 = vmatpush2.msra.mxu0 0.0
    %2056 = vmatprep.subr.mxu0 0.0
    %2057 = vmatpush2.msra.mxu0 0.0
    %2058 = vmatprep.subr.mxu0 0.0
    %2059 = vmatpush2.msra.mxu0 0.0
    %2060 = vmatprep.subr.mxu0 0.0
    %2061 = vmatpush2.msra.mxu0 0.0
    %2062 = vmatprep.subr.mxu0 0.0
    %2063 = vmatpush2.msra.mxu0 0.0
    %2064 = vmatprep.subr.mxu0 0.0
    %2065 = vmatpush2.msra.mxu0 0.0
    %2066 = vmatprep.subr.mxu0 0.0
    %2067 = vmatpush2.msra.mxu0 0.0
    %2068 = vmatprep.subr.mxu0 0.0
    %2069 = vmatpush2.msra.mxu0 0.0
    %2070 = vmatprep.subr.mxu0 0.0
    %2071 = vmatpush2.msra.mxu0 0.0
    %2072 = vmatprep.subr.mxu0 0.0
    %2073 = vmatpush2.msra.mxu0 0.0
    %2074 = vmatprep.subr.mxu0 0.0
    %2075 = vmatpush2.msra.mxu0 0.0
    %2076 = vmatprep.mubr.f32.mxu0 0.0
    %2077 = vmatmul.mubr.f32.gmra.mxu0 %v2010
    %v2078 = vpop.f32.mrf.mxu0
    %v2079 = vadd.f32 %v2004, %v2078
    %v2080 = vpop.f32.mrf.mxu0
    %2081 = vdwg.mxu0
    %vm2082 = vcmask 17408
    %2083 = vst.msk [vmem:[#allocation11] sm:$0x3] %vm2082, %v2079
    // Predicated region
    $region54: #{tpu_custom_call.1} parent=1 // pred_check
      _
    $region55: #{tpu_custom_call.1} parent=1 // pred_check_branch
      %2085 = sbr.rel (0) target = $region57
    $region56: #{tpu_custom_call.1} parent=1 // pred_region
      %s2087 = ssub.s32 32, 32
      %2088 = vsyncadd [#allocation5], %s2087
      %s2090 = sshll.u32 [#allocation11], 4
      %s2091 = int_to_ptr.vmem [resolvable:$true] %s2090
      %2093 = dma.vmem_to_hbm [thread:$0]  %s2091, 32, %s9, [#allocation5]
    $region57: #{tpu_custom_call.1} parent=1 // pred_fallthru
      _
    // Predicated region
    $region58: #{tpu_custom_call.1} parent=1 // pred_check
      _
    $region59: #{tpu_custom_call.1} parent=1 // pred_check_branch
      %2095 = sbr.rel (0) target = $region61
    $region60: #{tpu_custom_call.1} parent=1 // pred_region
      %2096 = dma.done [#allocation5], 32
    $region61: #{tpu_custom_call.1} parent=1 // pred_fallthru
      _
    %2097 = vsyncpa [#allocation4], 1
    %2098 = vsyncpa [#allocation7], 1
    %2099 = vsyncpa [#allocation10], 1
    %2100 = vsyncpa [#allocation5], 1

</llo_original>
